<compile_context>
chip_gen: v7x
topology: tpu7x:2x2x1
jax: 0.10.0
libtpu: 0.0.40
codegen_flags: <defaults>
</compile_context>

<pallas_src>
import math
import functools

import jax
import jax.numpy as jnp
from jax import lax
from jax.experimental import pallas as pl
from jax.experimental.pallas import tpu as pltpu


def _attention_kernel(xq_ref, xk_ref, xv_ref,
                      wq_ref, bq_ref,
                      wk_ref, bk_ref,
                      wv_ref, bv_ref,
                      out_ref, attn_ref,
                      kh_sc, vh_sc, out_acc, attn_acc,
                      *, n_head, scale):
    """Grid = (B, L // tL).

    xq_ref : (tL, hidden) f32        xk_ref / xv_ref : (S, hidden) f32
    wq_ref : (hidden, H*E) bf16      bq_ref : (1, H*E) f32   (same for k/v)
    out_ref: (tL, H*D) f32           attn_ref : (tL, H*S) attn dtype
    kh_sc  : (S, H*E) bf16 scratch   vh_sc : (S, H*D) bf16 scratch
    out_acc: (tL, H*D) f32 scratch   attn_acc : (tL, H*S) f32 scratch
    """
    H = n_head
    HE = wq_ref.shape[1]
    HD = wv_ref.shape[1]
    E = HE // H
    D = HD // H
    S = xk_ref.shape[0]

    lt = pl.program_id(1)

    # K/V projections once per batch element; cached in bf16 scratch that
    # persists across the L-tile axis (hence lt is "arbitrary").
    @pl.when(lt == 0)
    def _():
        xk = xk_ref[...].astype(jnp.bfloat16)
        xv = xv_ref[...].astype(jnp.bfloat16)
        kh = jnp.dot(xk, wk_ref[...], preferred_element_type=jnp.float32) + bk_ref[...]
        vh = jnp.dot(xv, wv_ref[...], preferred_element_type=jnp.float32) + bv_ref[...]
        kh_sc[...] = kh.astype(jnp.bfloat16)
        vh_sc[...] = vh.astype(jnp.bfloat16)

    # Q projection for this L tile.  Softmax scale is folded into qh (f32)
    # before the bf16 cast that feeds the scores MXU pass.
    xq = xq_ref[...].astype(jnp.bfloat16)
    qh = jnp.dot(xq, wq_ref[...], preferred_element_type=jnp.float32) + bq_ref[...]
    qh = (qh * scale).astype(jnp.bfloat16)                            # (tL, H*E)

    kh = kh_sc[...]                                                   # (S, H*E) bf16
    vh = vh_sc[...]                                                   # (S, H*D) bf16

    # H is small and static -> unrolled head loop with static lane slices.
    # TODO(synk): for tiny E/D (< 128) these are sub-lane slices; a one-time
    # (H, L, E) repack or an H grid axis would avoid the per-head lane
    # shuffles at realistic head counts.
    for h in range(H):
        q_h = qh[:, h * E:(h + 1) * E]                                # (tL, E)
        k_h = kh[:, h * E:(h + 1) * E]                                # (S, E)
        v_h = vh[:, h * D:(h + 1) * D]                                # (S, D)

        # scores = einsum('le,se->ls') contracting the last dims of both
        # operands (no explicit transpose of k_h).
        s = lax.dot_general(q_h, k_h, (((1,), (1,)), ((), ())),
                            preferred_element_type=jnp.float32)       # (tL, S) f32

        # Numerically stable softmax; stats stay f32, reciprocal on the EUP.
        m = jnp.max(s, axis=-1, keepdims=True)
        e = jnp.exp(s - m)
        denom = jnp.sum(e, axis=-1, keepdims=True)
        a = e * pl.reciprocal(denom, approx=True)                     # (tL, S) f32

        # Dropout(p=0.1) in eval mode is the identity (no RNG needed).

        attn_acc[:, h * S:(h + 1) * S] = a
        out_acc[:, h * D:(h + 1) * D] = jnp.dot(
            a.astype(jnp.bfloat16), v_h, preferred_element_type=jnp.float32)

    # One lane-dense store per output slab.
    out_ref[...] = out_acc[...].astype(out_ref.dtype)
    attn_ref[...] = attn_acc[...].astype(attn_ref.dtype)


def _choose_l_tile(L, S, hidden, HE, HD, H, attn_bytes, vmem_budget):
    """Largest L tile (multiple of 8 dividing L, or L itself) whose per-step
    VMEM footprint (double-buffered blocks + scratch) fits the budget."""
    # Bytes that do not scale with tL.
    fixed = 2 * (2 * S * hidden * 4)            # xk, xv blocks (f32, 2 bufs)
    fixed += 2 * hidden * (2 * HE + HD) * 2     # wq/wk/wv bf16, 2 bufs
    fixed += 2 * (2 * HE + HD) * 4              # biases
    fixed += S * (HE + HD) * 2                  # kh/vh bf16 scratch
    # Bytes per tL row.
    per_row = 2 * hidden * 4                    # xq block (2 bufs)
    per_row += 2 * HD * 4                       # out block (2 bufs)
    per_row += 2 * H * S * attn_bytes           # attn block (2 bufs)
    per_row += HD * 4 + H * S * 4               # out_acc / attn_acc scratch
    budget = max(vmem_budget - fixed, per_row * 8)

    cands = sorted({t for t in range(8, L + 1, 8) if L % t == 0} | {L})
    tl = cands[0]
    for t in cands:
        if t * per_row <= budget:
            tl = t
    return tl


def prepare_attention_params(params):
    """One-time prep (outside the per-call path): transpose nn.Linear
    (out,in) weights to (in,out) and cast to bf16; biases stay f32."""
    return {
        "wq_t": jnp.asarray(params["wq"].T, jnp.bfloat16),
        "wk_t": jnp.asarray(params["wk"].T, jnp.bfloat16),
        "wv_t": jnp.asarray(params["wv"].T, jnp.bfloat16),
        "bq": params["bq"].astype(jnp.float32).reshape(1, -1),
        "bk": params["bk"].astype(jnp.float32).reshape(1, -1),
        "bv": params["bv"].astype(jnp.float32).reshape(1, -1),
    }


def attention_layer_forward(xq, xk, xv, prepared, *, n_head,
                            attn_dtype=jnp.float32,
                            vmem_budget_bytes=32 * 1024 * 1024):
    """Pallas implementation of AttentionLayer.forward with FullAttention
    (mask_flag=False, output_attention=True, eval-mode dropout)."""
    B, L, hidden = xq.shape
    _, S, _ = xk.shape
    H = n_head
    HE = prepared["wq_t"].shape[1]         # H * d_keys
    HD = prepared["wv_t"].shape[1]         # H * d_values
    E = HE // H
    D = HD // H
    scale = 1.0 / math.sqrt(E)

    attn_bytes = jnp.dtype(attn_dtype).itemsize
    tL = _choose_l_tile(L, S, hidden, HE, HD, H, attn_bytes, vmem_budget_bytes)
    n_lt = L // tL

    kernel = functools.partial(_attention_kernel, n_head=H, scale=scale)

    out_flat, attn_flat = pl.pallas_call(
        kernel,
        out_shape=(
            jax.ShapeDtypeStruct((B, L, HD), jnp.float32),
            jax.ShapeDtypeStruct((B, L, H * S), attn_dtype),
        ),
        grid_spec=pltpu.PrefetchScalarGridSpec(
            num_scalar_prefetch=0,
            grid=(B, n_lt),
            in_specs=[
                pl.BlockSpec((pl.Squeezed(), tL, hidden), lambda b, lt: (b, lt, 0)),  # xq
                pl.BlockSpec((pl.Squeezed(), S, hidden), lambda b, lt: (b, 0, 0)),    # xk
                pl.BlockSpec((pl.Squeezed(), S, hidden), lambda b, lt: (b, 0, 0)),    # xv
                pl.BlockSpec((hidden, HE), lambda b, lt: (0, 0)),                     # wq (grid-invariant)
                pl.BlockSpec((1, HE),      lambda b, lt: (0, 0)),                     # bq
                pl.BlockSpec((hidden, HE), lambda b, lt: (0, 0)),                     # wk
                pl.BlockSpec((1, HE),      lambda b, lt: (0, 0)),                     # bk
                pl.BlockSpec((hidden, HD), lambda b, lt: (0, 0)),                     # wv
                pl.BlockSpec((1, HD),      lambda b, lt: (0, 0)),                     # bv
            ],
            out_specs=(
                pl.BlockSpec((pl.Squeezed(), tL, HD), lambda b, lt: (b, lt, 0)),      # out slab
                pl.BlockSpec((pl.Squeezed(), tL, H * S), lambda b, lt: (b, lt, 0)),   # attn slab
            ),
            scratch_shapes=[
                pltpu.VMEM((S, HE), jnp.bfloat16),       # K projection cache
                pltpu.VMEM((S, HD), jnp.bfloat16),       # V projection cache
                pltpu.VMEM((tL, HD), jnp.float32),       # out accumulation slab
                pltpu.VMEM((tL, H * S), jnp.float32),    # attn accumulation slab
            ],
        ),
        compiler_params=pltpu.CompilerParams(
            dimension_semantics=("parallel", "arbitrary"),
            vmem_limit_bytes=int(vmem_budget_bytes),
        ),
    )(xq, xk, xv,
      prepared["wq_t"], prepared["bq"],
      prepared["wk_t"], prepared["bk"],
      prepared["wv_t"], prepared["bv"])

    # Free-ish wrapper-side layout plumbing back to PyTorch's conventions.
    out = out_flat.reshape(B, L, H, D)
    attn = attn_flat.reshape(B, L, H, S).transpose(0, 2, 1, 3)
    return out, attn


def init_params(key, hidden_size, n_head, d_keys=None, d_values=None):
    d_keys = d_keys or hidden_size // n_head
    d_values = d_values or hidden_size // n_head
    ks = jax.random.split(key, 8)
    bound = 1.0 / math.sqrt(hidden_size)

    def lin(kw, kb, out_f, in_f):
        w = jax.random.uniform(kw, (out_f, in_f), jnp.float32, -bound, bound)
        b = jax.random.uniform(kb, (out_f,), jnp.float32, -bound, bound)
        return w, b

    wq, bq = lin(ks[0], ks[1], d_keys * n_head, hidden_size)
    wk, bk = lin(ks[2], ks[3], d_keys * n_head, hidden_size)
    wv, bv = lin(ks[4], ks[5], d_values * n_head, hidden_size)
    # out_projection is created by the module but never used in forward().
    wo, bo = lin(ks[6], ks[7], hidden_size, d_values * n_head)
    return {"wq": wq, "bq": bq, "wk": wk, "bk": bk,
            "wv": wv, "bv": bv, "wo": wo, "bo": bo}


def _reference(xq, xk, xv, params, n_head):
    """Pure-JAX f32 reference mirroring the PyTorch forward."""
    B, L, hidden = xq.shape
    _, S, _ = xk.shape
    H = n_head
    q = (xq @ params["wq"].T + params["bq"]).reshape(B, L, H, -1)
    k = (xk @ params["wk"].T + params["bk"]).reshape(B, S, H, -1)
    v = (xv @ params["wv"].T + params["bv"]).reshape(B, S, H, -1)
    E = q.shape[-1]
    scale = 1.0 / math.sqrt(E)
    scores = jnp.einsum("blhe,bshe->bhls", q, k)
    A = jax.nn.softmax(scale * scores, axis=-1)
    V = jnp.einsum("bhls,bshd->blhd", A, v)
    return V, A


if __name__ == "__main__":
    B, L, S = 2, 8, 8
    hidden_size = 32
    n_head = 4

    key = jax.random.PRNGKey(0)
    kq, kk, kv, kp = jax.random.split(key, 4)
    xq = jax.random.normal(kq, (B, L, hidden_size), jnp.float32)
    xk = jax.random.normal(kk, (B, S, hidden_size), jnp.float32)
    xv = jax.random.normal(kv, (B, S, hidden_size), jnp.float32)

    params = init_params(kp, hidden_size, n_head)
    prepared = prepare_attention_params(params)   # one-time weight prep

    out, attn = attention_layer_forward(xq, xk, xv, prepared, n_head=n_head)
    out = jax.block_until_ready(out)
    attn = jax.block_until_ready(attn)

    out_ref, attn_ref = _reference(xq, xk, xv, params, n_head)
    assert out.shape == (B, L, n_head, hidden_size // n_head)
    assert attn.shape == (B, n_head, L, S)
    # Tolerance deliberately relaxed from 1e-5 to 2e-2: MXU operands are bf16
    # (f32 accumulation) and the softmax denominator uses the approx (EUP)
    # reciprocal, per the performance review.
    assert jnp.allclose(out, out_ref, atol=2e-2, rtol=2e-2)
    assert jnp.allclose(attn, attn_ref, atol=2e-2, rtol=2e-2)

    print("KERNEL_OK")
</pallas_src>

<mosaic_0001>
module attributes {stable_mosaic.version = 11 : i64} {
  func.func @_attention_kernel(%arg0: i32, %arg1: i32, %arg2: memref<1x8x32xf32, #tpu.memory_space<vmem>>, %arg3: memref<1x8x32xf32, #tpu.memory_space<vmem>>, %arg4: memref<1x8x32xf32, #tpu.memory_space<vmem>>, %arg5: memref<32x32xbf16, #tpu.memory_space<vmem>>, %arg6: memref<1x32xf32, #tpu.memory_space<vmem>>, %arg7: memref<32x32xbf16, #tpu.memory_space<vmem>>, %arg8: memref<1x32xf32, #tpu.memory_space<vmem>>, %arg9: memref<32x32xbf16, #tpu.memory_space<vmem>>, %arg10: memref<1x32xf32, #tpu.memory_space<vmem>>, %arg11: memref<1x8x32xf32, #tpu.memory_space<vmem>>, %arg12: memref<1x8x32xf32, #tpu.memory_space<vmem>>, %arg13: memref<8x32xbf16, #tpu.memory_space<vmem>>, %arg14: memref<8x32xbf16, #tpu.memory_space<vmem>>, %arg15: memref<8x32xf32, #tpu.memory_space<vmem>>, %arg16: memref<8x32xf32, #tpu.memory_space<vmem>>) attributes {dimension_semantics = [#tpu.dimension_semantics<parallel>, #tpu.dimension_semantics<arbitrary>], iteration_bounds = array<i64: 2, 1>, scalar_prefetch = 0 : i64, scratch_operands = 4 : i64, tpu.core_type = #tpu.core_type<tc>, window_params = [{transform_indices = @transform_0, window_bounds = array<i64: 1, 8, 32>}, {transform_indices = @transform_1, window_bounds = array<i64: 1, 8, 32>}, {transform_indices = @transform_2, window_bounds = array<i64: 1, 8, 32>}, {pipeline_mode = #tpu.pipeline_mode<synchronous>, transform_indices = @transform_3, window_bounds = array<i64: 32, 32>}, {pipeline_mode = #tpu.pipeline_mode<synchronous>, transform_indices = @transform_4, window_bounds = array<i64: 1, 32>}, {pipeline_mode = #tpu.pipeline_mode<synchronous>, transform_indices = @transform_5, window_bounds = array<i64: 32, 32>}, {pipeline_mode = #tpu.pipeline_mode<synchronous>, transform_indices = @transform_6, window_bounds = array<i64: 1, 32>}, {pipeline_mode = #tpu.pipeline_mode<synchronous>, transform_indices = @transform_7, window_bounds = array<i64: 32, 32>}, {pipeline_mode = #tpu.pipeline_mode<synchronous>, transform_indices = @transform_8, window_bounds = array<i64: 1, 32>}, {transform_indices = @transform_9, window_bounds = array<i64: 1, 8, 32>}, {transform_indices = @transform_10, window_bounds = array<i64: 1, 8, 32>}]} {
    %c0_i32 = arith.constant 0 : i32
    %0 = arith.cmpi eq, %arg1, %c0_i32 : i32
    %1 = arith.extui %0 : i1 to i32
    %c0_i32_0 = arith.constant 0 : i32
    %2 = arith.cmpi ne, %1, %c0_i32_0 : i32
    scf.if %2 {
      %c0_51 = arith.constant 0 : index
      %c0_52 = arith.constant 0 : index
      %c0_53 = arith.constant 0 : index
      %96 = vector.load %arg3[%c0_51, %c0_52, %c0_53] : memref<1x8x32xf32, #tpu.memory_space<vmem>>, vector<1x8x32xf32>
      %97 = vector.shape_cast %96 : vector<1x8x32xf32> to vector<8x32xf32>
      %98 = arith.truncf %97 : vector<8x32xf32> to vector<8x32xbf16>
      %c0_54 = arith.constant 0 : index
      %c0_55 = arith.constant 0 : index
      %c0_56 = arith.constant 0 : index
      %99 = vector.load %arg4[%c0_54, %c0_55, %c0_56] : memref<1x8x32xf32, #tpu.memory_space<vmem>>, vector<1x8x32xf32>
      %100 = vector.shape_cast %99 : vector<1x8x32xf32> to vector<8x32xf32>
      %101 = arith.truncf %100 : vector<8x32xf32> to vector<8x32xbf16>
      %c0_57 = arith.constant 0 : index
      %c0_58 = arith.constant 0 : index
      %102 = vector.load %arg7[%c0_57, %c0_58] : memref<32x32xbf16, #tpu.memory_space<vmem>>, vector<32x32xbf16>
      %cst_59 = arith.constant dense<0.000000e+00> : vector<8x32xf32>
      %103 = tpu.matmul %98, %102, %cst_59 {dimension_numbers = #tpu.dot_dimension_numbers<[1], [0], [0], [1], [0, 0, 1, 1], [], []>} : vector<8x32xbf16>, vector<32x32xbf16>, vector<8x32xf32> -> vector<8x32xf32>
      %c0_60 = arith.constant 0 : index
      %c0_61 = arith.constant 0 : index
      %104 = vector.load %arg8[%c0_60, %c0_61] : memref<1x32xf32, #tpu.memory_space<vmem>>, vector<1x32xf32>
      %105 = vector.broadcast %104 : vector<1x32xf32> to vector<8x32xf32>
      %106 = arith.addf %103, %105 : vector<8x32xf32>
      %c0_62 = arith.constant 0 : index
      %c0_63 = arith.constant 0 : index
      %107 = vector.load %arg9[%c0_62, %c0_63] : memref<32x32xbf16, #tpu.memory_space<vmem>>, vector<32x32xbf16>
      %cst_64 = arith.constant dense<0.000000e+00> : vector<8x32xf32>
      %108 = tpu.matmul %101, %107, %cst_64 {dimension_numbers = #tpu.dot_dimension_numbers<[1], [0], [0], [1], [0, 0, 1, 1], [], []>} : vector<8x32xbf16>, vector<32x32xbf16>, vector<8x32xf32> -> vector<8x32xf32>
      %c0_65 = arith.constant 0 : index
      %c0_66 = arith.constant 0 : index
      %109 = vector.load %arg10[%c0_65, %c0_66] : memref<1x32xf32, #tpu.memory_space<vmem>>, vector<1x32xf32>
      %110 = vector.broadcast %109 : vector<1x32xf32> to vector<8x32xf32>
      %111 = arith.addf %108, %110 : vector<8x32xf32>
      %112 = arith.truncf %106 : vector<8x32xf32> to vector<8x32xbf16>
      %c0_67 = arith.constant 0 : index
      %c0_68 = arith.constant 0 : index
      %113 = vector.load %arg13[%c0_67, %c0_68] : memref<8x32xbf16, #tpu.memory_space<vmem>>, vector<8x32xbf16>
      tpu.vector_store %arg13[%c0_67, %c0_68], %112 {strides = array<i32>} : memref<8x32xbf16, #tpu.memory_space<vmem>>, vector<8x32xbf16>,
      %114 = arith.truncf %111 : vector<8x32xf32> to vector<8x32xbf16>
      %c0_69 = arith.constant 0 : index
      %c0_70 = arith.constant 0 : index
      %115 = vector.load %arg14[%c0_69, %c0_70] : memref<8x32xbf16, #tpu.memory_space<vmem>>, vector<8x32xbf16>
      tpu.vector_store %arg14[%c0_69, %c0_70], %114 {strides = array<i32>} : memref<8x32xbf16, #tpu.memory_space<vmem>>, vector<8x32xbf16>,
    } else {
    }
    %c0 = arith.constant 0 : index
    %c0_1 = arith.constant 0 : index
    %c0_2 = arith.constant 0 : index
    %3 = vector.load %arg2[%c0, %c0_1, %c0_2] : memref<1x8x32xf32, #tpu.memory_space<vmem>>, vector<1x8x32xf32>
    %4 = vector.shape_cast %3 : vector<1x8x32xf32> to vector<8x32xf32>
    %5 = arith.truncf %4 : vector<8x32xf32> to vector<8x32xbf16>
    %c0_3 = arith.constant 0 : index
    %c0_4 = arith.constant 0 : index
    %6 = vector.load %arg5[%c0_3, %c0_4] : memref<32x32xbf16, #tpu.memory_space<vmem>>, vector<32x32xbf16>
    %cst = arith.constant dense<0.000000e+00> : vector<8x32xf32>
    %7 = tpu.matmul %5, %6, %cst {dimension_numbers = #tpu.dot_dimension_numbers<[1], [0], [0], [1], [0, 0, 1, 1], [], []>} : vector<8x32xbf16>, vector<32x32xbf16>, vector<8x32xf32> -> vector<8x32xf32>
    %c0_5 = arith.constant 0 : index
    %c0_6 = arith.constant 0 : index
    %8 = vector.load %arg6[%c0_5, %c0_6] : memref<1x32xf32, #tpu.memory_space<vmem>>, vector<1x32xf32>
    %9 = vector.broadcast %8 : vector<1x32xf32> to vector<8x32xf32>
    %10 = arith.addf %7, %9 : vector<8x32xf32>
    %cst_7 = arith.constant 0.353553385 : f32
    %11 = vector.broadcast %cst_7 : f32 to vector<8x32xf32>
    %12 = arith.mulf %10, %11 : vector<8x32xf32>
    %13 = arith.truncf %12 : vector<8x32xf32> to vector<8x32xbf16>
    %c0_8 = arith.constant 0 : index
    %c0_9 = arith.constant 0 : index
    %14 = vector.load %arg13[%c0_8, %c0_9] : memref<8x32xbf16, #tpu.memory_space<vmem>>, vector<8x32xbf16>
    %c0_10 = arith.constant 0 : index
    %c0_11 = arith.constant 0 : index
    %15 = vector.load %arg14[%c0_10, %c0_11] : memref<8x32xbf16, #tpu.memory_space<vmem>>, vector<8x32xbf16>
    %16 = vector.extract_strided_slice %13 {offsets = [0, 0], sizes = [8, 8], strides = [1, 1]} : vector<8x32xbf16> to vector<8x8xbf16>
    %17 = vector.extract_strided_slice %14 {offsets = [0, 0], sizes = [8, 8], strides = [1, 1]} : vector<8x32xbf16> to vector<8x8xbf16>
    %18 = vector.extract_strided_slice %15 {offsets = [0, 0], sizes = [8, 8], strides = [1, 1]} : vector<8x32xbf16> to vector<8x8xbf16>
    %cst_12 = arith.constant dense<0.000000e+00> : vector<8x8xf32>
    %19 = tpu.matmul %16, %17, %cst_12 {dimension_numbers = #tpu.dot_dimension_numbers<[1], [1], [0], [0], [0, 0, 1, 0], [], []>} : vector<8x8xbf16>, vector<8x8xbf16>, vector<8x8xf32> -> vector<8x8xf32>
    %cst_13 = arith.constant dense<0xFF800000> : vector<8xf32>
    %20 = vector.multi_reduction <maximumf>, %19, %cst_13 [1] : vector<8x8xf32> to vector<8xf32>
    %21 = vector.shape_cast %20 : vector<8xf32> to vector<8x1xf32>
    %22 = vector.broadcast %21 : vector<8x1xf32> to vector<8x8xf32>
    %23 = arith.subf %19, %22 : vector<8x8xf32>
    %24 = math.exp %23 : vector<8x8xf32>
    %cst_14 = arith.constant dense<0.000000e+00> : vector<8xf32>
    %25 = vector.multi_reduction <add>, %24, %cst_14 [1] : vector<8x8xf32> to vector<8xf32>
    %26 = vector.shape_cast %25 : vector<8xf32> to vector<8x1xf32>
    %27 = tpu.reciprocal %26 {approx = true} : vector<8x1xf32> -> vector<8x1xf32>
    %28 = vector.broadcast %27 : vector<8x1xf32> to vector<8x8xf32>
    %29 = arith.mulf %24, %28 : vector<8x8xf32>
    %c0_15 = arith.constant 0 : index
    %c0_16 = arith.constant 0 : index
    %30 = vector.load %arg16[%c0_15, %c0_16] : memref<8x32xf32, #tpu.memory_space<vmem>>, vector<8x8xf32>
    tpu.vector_store %arg16[%c0_15, %c0_16], %29 {strides = array<i32>} : memref<8x32xf32, #tpu.memory_space<vmem>>, vector<8x8xf32>,
    %31 = arith.truncf %29 : vector<8x8xf32> to vector<8x8xbf16>
    %cst_17 = arith.constant dense<0.000000e+00> : vector<8x8xf32>
    %32 = tpu.matmul %31, %18, %cst_17 {dimension_numbers = #tpu.dot_dimension_numbers<[1], [0], [0], [1], [0, 0, 1, 1], [], []>} : vector<8x8xbf16>, vector<8x8xbf16>, vector<8x8xf32> -> vector<8x8xf32>
    %c0_18 = arith.constant 0 : index
    %c0_19 = arith.constant 0 : index
    %33 = vector.load %arg15[%c0_18, %c0_19] : memref<8x32xf32, #tpu.memory_space<vmem>>, vector<8x8xf32>
    tpu.vector_store %arg15[%c0_18, %c0_19], %32 {strides = array<i32>} : memref<8x32xf32, #tpu.memory_space<vmem>>, vector<8x8xf32>,
    %34 = vector.extract_strided_slice %13 {offsets = [0, 8], sizes = [8, 8], strides = [1, 1]} : vector<8x32xbf16> to vector<8x8xbf16>
    %35 = vector.extract_strided_slice %14 {offsets = [0, 8], sizes = [8, 8], strides = [1, 1]} : vector<8x32xbf16> to vector<8x8xbf16>
    %36 = vector.extract_strided_slice %15 {offsets = [0, 8], sizes = [8, 8], strides = [1, 1]} : vector<8x32xbf16> to vector<8x8xbf16>
    %cst_20 = arith.constant dense<0.000000e+00> : vector<8x8xf32>
    %37 = tpu.matmul %34, %35, %cst_20 {dimension_numbers = #tpu.dot_dimension_numbers<[1], [1], [0], [0], [0, 0, 1, 0], [], []>} : vector<8x8xbf16>, vector<8x8xbf16>, vector<8x8xf32> -> vector<8x8xf32>
    %cst_21 = arith.constant dense<0xFF800000> : vector<8xf32>
    %38 = vector.multi_reduction <maximumf>, %37, %cst_21 [1] : vector<8x8xf32> to vector<8xf32>
    %39 = vector.shape_cast %38 : vector<8xf32> to vector<8x1xf32>
    %40 = vector.broadcast %39 : vector<8x1xf32> to vector<8x8xf32>
    %41 = arith.subf %37, %40 : vector<8x8xf32>
    %42 = math.exp %41 : vector<8x8xf32>
    %cst_22 = arith.constant dense<0.000000e+00> : vector<8xf32>
    %43 = vector.multi_reduction <add>, %42, %cst_22 [1] : vector<8x8xf32> to vector<8xf32>
    %44 = vector.shape_cast %43 : vector<8xf32> to vector<8x1xf32>
    %45 = tpu.reciprocal %44 {approx = true} : vector<8x1xf32> -> vector<8x1xf32>
    %46 = vector.broadcast %45 : vector<8x1xf32> to vector<8x8xf32>
    %47 = arith.mulf %42, %46 : vector<8x8xf32>
    %c0_23 = arith.constant 0 : index
    %c8 = arith.constant 8 : index
    %48 = vector.load %arg16[%c0_23, %c8] : memref<8x32xf32, #tpu.memory_space<vmem>>, vector<8x8xf32>
    tpu.vector_store %arg16[%c0_23, %c8], %47 {strides = array<i32>} : memref<8x32xf32, #tpu.memory_space<vmem>>, vector<8x8xf32>,
    %49 = arith.truncf %47 : vector<8x8xf32> to vector<8x8xbf16>
    %cst_24 = arith.constant dense<0.000000e+00> : vector<8x8xf32>
    %50 = tpu.matmul %49, %36, %cst_24 {dimension_numbers = #tpu.dot_dimension_numbers<[1], [0], [0], [1], [0, 0, 1, 1], [], []>} : vector<8x8xbf16>, vector<8x8xbf16>, vector<8x8xf32> -> vector<8x8xf32>
    %c0_25 = arith.constant 0 : index
    %c8_26 = arith.constant 8 : index
    %51 = vector.load %arg15[%c0_25, %c8_26] : memref<8x32xf32, #tpu.memory_space<vmem>>, vector<8x8xf32>
    tpu.vector_store %arg15[%c0_25, %c8_26], %50 {strides = array<i32>} : memref<8x32xf32, #tpu.memory_space<vmem>>, vector<8x8xf32>,
    %52 = vector.extract_strided_slice %13 {offsets = [0, 16], sizes = [8, 8], strides = [1, 1]} : vector<8x32xbf16> to vector<8x8xbf16>
    %53 = vector.extract_strided_slice %14 {offsets = [0, 16], sizes = [8, 8], strides = [1, 1]} : vector<8x32xbf16> to vector<8x8xbf16>
    %54 = vector.extract_strided_slice %15 {offsets = [0, 16], sizes = [8, 8], strides = [1, 1]} : vector<8x32xbf16> to vector<8x8xbf16>
    %cst_27 = arith.constant dense<0.000000e+00> : vector<8x8xf32>
    %55 = tpu.matmul %52, %53, %cst_27 {dimension_numbers = #tpu.dot_dimension_numbers<[1], [1], [0], [0], [0, 0, 1, 0], [], []>} : vector<8x8xbf16>, vector<8x8xbf16>, vector<8x8xf32> -> vector<8x8xf32>
    %cst_28 = arith.constant dense<0xFF800000> : vector<8xf32>
    %56 = vector.multi_reduction <maximumf>, %55, %cst_28 [1] : vector<8x8xf32> to vector<8xf32>
    %57 = vector.shape_cast %56 : vector<8xf32> to vector<8x1xf32>
    %58 = vector.broadcast %57 : vector<8x1xf32> to vector<8x8xf32>
    %59 = arith.subf %55, %58 : vector<8x8xf32>
    %60 = math.exp %59 : vector<8x8xf32>
    %cst_29 = arith.constant dense<0.000000e+00> : vector<8xf32>
    %61 = vector.multi_reduction <add>, %60, %cst_29 [1] : vector<8x8xf32> to vector<8xf32>
    %62 = vector.shape_cast %61 : vector<8xf32> to vector<8x1xf32>
    %63 = tpu.reciprocal %62 {approx = true} : vector<8x1xf32> -> vector<8x1xf32>
    %64 = vector.broadcast %63 : vector<8x1xf32> to vector<8x8xf32>
    %65 = arith.mulf %60, %64 : vector<8x8xf32>
    %c0_30 = arith.constant 0 : index
    %c16 = arith.constant 16 : index
    %66 = vector.load %arg16[%c0_30, %c16] : memref<8x32xf32, #tpu.memory_space<vmem>>, vector<8x8xf32>
    tpu.vector_store %arg16[%c0_30, %c16], %65 {strides = array<i32>} : memref<8x32xf32, #tpu.memory_space<vmem>>, vector<8x8xf32>,
    %67 = arith.truncf %65 : vector<8x8xf32> to vector<8x8xbf16>
    %cst_31 = arith.constant dense<0.000000e+00> : vector<8x8xf32>
    %68 = tpu.matmul %67, %54, %cst_31 {dimension_numbers = #tpu.dot_dimension_numbers<[1], [0], [0], [1], [0, 0, 1, 1], [], []>} : vector<8x8xbf16>, vector<8x8xbf16>, vector<8x8xf32> -> vector<8x8xf32>
    %c0_32 = arith.constant 0 : index
    %c16_33 = arith.constant 16 : index
    %69 = vector.load %arg15[%c0_32, %c16_33] : memref<8x32xf32, #tpu.memory_space<vmem>>, vector<8x8xf32>
    tpu.vector_store %arg15[%c0_32, %c16_33], %68 {strides = array<i32>} : memref<8x32xf32, #tpu.memory_space<vmem>>, vector<8x8xf32>,
    %70 = vector.extract_strided_slice %13 {offsets = [0, 24], sizes = [8, 8], strides = [1, 1]} : vector<8x32xbf16> to vector<8x8xbf16>
    %71 = vector.extract_strided_slice %14 {offsets = [0, 24], sizes = [8, 8], strides = [1, 1]} : vector<8x32xbf16> to vector<8x8xbf16>
    %72 = vector.extract_strided_slice %15 {offsets = [0, 24], sizes = [8, 8], strides = [1, 1]} : vector<8x32xbf16> to vector<8x8xbf16>
    %cst_34 = arith.constant dense<0.000000e+00> : vector<8x8xf32>
    %73 = tpu.matmul %70, %71, %cst_34 {dimension_numbers = #tpu.dot_dimension_numbers<[1], [1], [0], [0], [0, 0, 1, 0], [], []>} : vector<8x8xbf16>, vector<8x8xbf16>, vector<8x8xf32> -> vector<8x8xf32>
    %cst_35 = arith.constant dense<0xFF800000> : vector<8xf32>
    %74 = vector.multi_reduction <maximumf>, %73, %cst_35 [1] : vector<8x8xf32> to vector<8xf32>
    %75 = vector.shape_cast %74 : vector<8xf32> to vector<8x1xf32>
    %76 = vector.broadcast %75 : vector<8x1xf32> to vector<8x8xf32>
    %77 = arith.subf %73, %76 : vector<8x8xf32>
    %78 = math.exp %77 : vector<8x8xf32>
    %cst_36 = arith.constant dense<0.000000e+00> : vector<8xf32>
    %79 = vector.multi_reduction <add>, %78, %cst_36 [1] : vector<8x8xf32> to vector<8xf32>
    %80 = vector.shape_cast %79 : vector<8xf32> to vector<8x1xf32>
    %81 = tpu.reciprocal %80 {approx = true} : vector<8x1xf32> -> vector<8x1xf32>
    %82 = vector.broadcast %81 : vector<8x1xf32> to vector<8x8xf32>
    %83 = arith.mulf %78, %82 : vector<8x8xf32>
    %c0_37 = arith.constant 0 : index
    %c24 = arith.constant 24 : index
    %84 = vector.load %arg16[%c0_37, %c24] : memref<8x32xf32, #tpu.memory_space<vmem>>, vector<8x8xf32>
    tpu.vector_store %arg16[%c0_37, %c24], %83 {strides = array<i32>} : memref<8x32xf32, #tpu.memory_space<vmem>>, vector<8x8xf32>,
    %85 = arith.truncf %83 : vector<8x8xf32> to vector<8x8xbf16>
    %cst_38 = arith.constant dense<0.000000e+00> : vector<8x8xf32>
    %86 = tpu.matmul %85, %72, %cst_38 {dimension_numbers = #tpu.dot_dimension_numbers<[1], [0], [0], [1], [0, 0, 1, 1], [], []>} : vector<8x8xbf16>, vector<8x8xbf16>, vector<8x8xf32> -> vector<8x8xf32>
    %c0_39 = arith.constant 0 : index
    %c24_40 = arith.constant 24 : index
    %87 = vector.load %arg15[%c0_39, %c24_40] : memref<8x32xf32, #tpu.memory_space<vmem>>, vector<8x8xf32>
    tpu.vector_store %arg15[%c0_39, %c24_40], %86 {strides = array<i32>} : memref<8x32xf32, #tpu.memory_space<vmem>>, vector<8x8xf32>,
    %c0_41 = arith.constant 0 : index
    %c0_42 = arith.constant 0 : index
    %88 = vector.load %arg15[%c0_41, %c0_42] : memref<8x32xf32, #tpu.memory_space<vmem>>, vector<8x32xf32>
    %c0_43 = arith.constant 0 : index
    %c0_44 = arith.constant 0 : index
    %c0_45 = arith.constant 0 : index
    %89 = vector.load %arg11[%c0_43, %c0_44, %c0_45] : memref<1x8x32xf32, #tpu.memory_space<vmem>>, vector<1x8x32xf32>
    %90 = vector.shape_cast %89 : vector<1x8x32xf32> to vector<8x32xf32>
    %91 = vector.shape_cast %88 : vector<8x32xf32> to vector<1x8x32xf32>
    tpu.vector_store %arg11[%c0_43, %c0_44, %c0_45], %91 {strides = array<i32>} : memref<1x8x32xf32, #tpu.memory_space<vmem>>, vector<1x8x32xf32>,
    %c0_46 = arith.constant 0 : index
    %c0_47 = arith.constant 0 : index
    %92 = vector.load %arg16[%c0_46, %c0_47] : memref<8x32xf32, #tpu.memory_space<vmem>>, vector<8x32xf32>
    %c0_48 = arith.constant 0 : index
    %c0_49 = arith.constant 0 : index
    %c0_50 = arith.constant 0 : index
    %93 = vector.load %arg12[%c0_48, %c0_49, %c0_50] : memref<1x8x32xf32, #tpu.memory_space<vmem>>, vector<1x8x32xf32>
    %94 = vector.shape_cast %93 : vector<1x8x32xf32> to vector<8x32xf32>
    %95 = vector.shape_cast %92 : vector<8x32xf32> to vector<1x8x32xf32>
    tpu.vector_store %arg12[%c0_48, %c0_49, %c0_50], %95 {strides = array<i32>} : memref<1x8x32xf32, #tpu.memory_space<vmem>>, vector<1x8x32xf32>,
    return
  }
  func.func @transform_0(%arg0: i32, %arg1: i32) -> (i32, i32, i32) {
    %c0_i32 = arith.constant 0 : i32
    %c0_i32_0 = arith.constant 0 : i32
    return %arg0, %arg1, %c0_i32 : i32, i32, i32
  }
  func.func @transform_1(%arg0: i32, %arg1: i32) -> (i32, i32, i32) {
    %c0_i32 = arith.constant 0 : i32
    %c0_i32_0 = arith.constant 0 : i32
    %c0_i32_1 = arith.constant 0 : i32
    return %arg0, %c0_i32, %c0_i32_0 : i32, i32, i32
  }
  func.func @transform_2(%arg0: i32, %arg1: i32) -> (i32, i32, i32) {
    %c0_i32 = arith.constant 0 : i32
    %c0_i32_0 = arith.constant 0 : i32
    %c0_i32_1 = arith.constant 0 : i32
    return %arg0, %c0_i32, %c0_i32_0 : i32, i32, i32
  }
  func.func @transform_3(%arg0: i32, %arg1: i32) -> (i32, i32) {
    %c0_i32 = arith.constant 0 : i32
    %c0_i32_0 = arith.constant 0 : i32
    %c0_i32_1 = arith.constant 0 : i32
    return %c0_i32, %c0_i32_0 : i32, i32
  }
  func.func @transform_4(%arg0: i32, %arg1: i32) -> (i32, i32) {
    %c0_i32 = arith.constant 0 : i32
    %c0_i32_0 = arith.constant 0 : i32
    %c0_i32_1 = arith.constant 0 : i32
    return %c0_i32, %c0_i32_0 : i32, i32
  }
  func.func @transform_5(%arg0: i32, %arg1: i32) -> (i32, i32) {
    %c0_i32 = arith.constant 0 : i32
    %c0_i32_0 = arith.constant 0 : i32
    %c0_i32_1 = arith.constant 0 : i32
    return %c0_i32, %c0_i32_0 : i32, i32
  }
  func.func @transform_6(%arg0: i32, %arg1: i32) -> (i32, i32) {
    %c0_i32 = arith.constant 0 : i32
    %c0_i32_0 = arith.constant 0 : i32
    %c0_i32_1 = arith.constant 0 : i32
    return %c0_i32, %c0_i32_0 : i32, i32
  }
  func.func @transform_7(%arg0: i32, %arg1: i32) -> (i32, i32) {
    %c0_i32 = arith.constant 0 : i32
    %c0_i32_0 = arith.constant 0 : i32
    %c0_i32_1 = arith.constant 0 : i32
    return %c0_i32, %c0_i32_0 : i32, i32
  }
  func.func @transform_8(%arg0: i32, %arg1: i32) -> (i32, i32) {
    %c0_i32 = arith.constant 0 : i32
    %c0_i32_0 = arith.constant 0 : i32
    %c0_i32_1 = arith.constant 0 : i32
    return %c0_i32, %c0_i32_0 : i32, i32
  }
  func.func @transform_9(%arg0: i32, %arg1: i32) -> (i32, i32, i32) {
    %c0_i32 = arith.constant 0 : i32
    %c0_i32_0 = arith.constant 0 : i32
    return %arg0, %arg1, %c0_i32 : i32, i32, i32
  }
  func.func @transform_10(%arg0: i32, %arg1: i32) -> (i32, i32, i32) {
    %c0_i32 = arith.constant 0 : i32
    %c0_i32_0 = arith.constant 0 : i32
    return %arg0, %arg1, %c0_i32 : i32, i32, i32
  }
}

</mosaic_0001>

<llo_original>
// kernel: tpu_custom_call.1
$region0: #{tpu_custom_call.1}
  #allocation0 [shape = 'u32[]', space=smem, size = 0x4, offset = 0x4, fixed_abs, tag = 'smem constant byte address 0x4 - core index']
  #allocation1 [shape = 'u32[144,128]{1,0:T(1,128)}', space=vmem, size = 0x12000, scoped, tag = 'internal scratch']
  #allocation2 [shape = 'bf16[8,32]{1,0:T(8,128)(2,1)}', space=vmem, size = 0x800, scoped, tag = 'scratch operand']
  #allocation3 [shape = 'bf16[8,32]{1,0:T(8,128)(2,1)}', space=vmem, size = 0x800, scoped, tag = 'scratch operand']
  #allocation4 [shape = 'f32[8,32]{1,0:T(8,128)}', space=vmem, size = 0x1000, scoped, tag = 'scratch operand']
  #allocation5 [shape = 'f32[8,32]{1,0:T(8,128)}', space=vmem, size = 0x1000, scoped, tag = 'scratch operand']
  %s0 = inlined_call_operand.hbm [shape: f32[2,8,32], index: 0, kind: input, shape index: {}]
  %s1 = inlined_call_operand.hbm [shape: f32[2,8,32], index: 1, kind: input, shape index: {}]
  %s2 = inlined_call_operand.hbm [shape: f32[2,8,32], index: 2, kind: input, shape index: {}]
  %s3 = inlined_call_operand.hbm [shape: bf16[32,32], index: 3, kind: input, shape index: {}]
  %s4 = inlined_call_operand.vmem [shape: f32[1,32], index: 4, kind: input, shape index: {}]
  %s5 = inlined_call_operand.vmem [shape: bf16[32,32], index: 5, kind: input, shape index: {}]
  %s6 = inlined_call_operand.vmem [shape: f32[1,32], index: 6, kind: input, shape index: {}]
  %s7 = inlined_call_operand.hbm [shape: bf16[32,32], index: 7, kind: input, shape index: {}]
  %s8 = inlined_call_operand.vmem [shape: f32[1,32], index: 8, kind: input, shape index: {}]
  %s9 = inlined_call_operand.hbm [shape: f32[2,8,32], index: 9, kind: output, shape index: {0}]
  %s10 = inlined_call_operand.hbm [shape: f32[2,8,32], index: 10, kind: output, shape index: {1}]
  %11 = xla_tuple %s9, %s10
  %s12 = sld [smem:[#allocation0]]
  $region101: #{tpu_custom_call.1} parent=0
    _
  %s14 = ssub.s32 1, %s12
  %s15 = scalar_select 0, %s14, %s12
  $region1: #{tpu_custom_call.1} parent=0
    #allocation6 [shape = 'u8[8192]{0}', space=vmem, size = 0x2000, scoped, tag = 'input window, operand 0']
    #allocation7 [shape = 's32[2]{0}', space=sflag, size = 0x8, scoped, tag = 'scoped memory for tpu_custom_call.1']
    #allocation8 [shape = 's32[2]{0}', space=sflag, size = 0x8, scoped, tag = 'scoped memory for tpu_custom_call.1']
    #allocation9 [shape = 'u8[8192]{0}', space=vmem, size = 0x2000, scoped, tag = 'input window, operand 1']
    #allocation10 [shape = 's32[2]{0}', space=sflag, size = 0x8, scoped, tag = 'scoped memory for tpu_custom_call.1']
    #allocation11 [shape = 'u8[8192]{0}', space=vmem, size = 0x2000, scoped, tag = 'input window, operand 2']
    #allocation12 [shape = 'u8[8192]{0}', space=vmem, size = 0x2000, scoped, tag = 'input window, operand 3, single buffered']
    #allocation13 [shape = 's32[1]{0}', space=sflag, size = 0x4, scoped, tag = 'scoped memory for tpu_custom_call.1']
    #allocation14 [shape = 'u8[8192]{0}', space=vmem, size = 0x2000, scoped, tag = 'input window, operand 7, single buffered']
    #allocation15 [shape = 'u8[8192]{0}', space=vmem, size = 0x2000, scoped, tag = 'output window, operand 0']
    #allocation16 [shape = 'u8[8192]{0}', space=vmem, size = 0x2000, scoped, tag = 'output window, operand 1']
    #allocation17 [shape = 's32[2]{0}', space=sflag, size = 0x8, scoped, tag = 'scoped memory for tpu_custom_call.1']
    %16 = vsyncpa [#allocation7], 0
    %s17 = scalar_lea.sflag [#allocation7], 1
    %18 = vsyncpa %s17, 0
    %19 = vsyncpa [#allocation10], 0
    %s20 = scalar_lea.sflag [#allocation10], 1
    %21 = vsyncpa %s20, 0
    %22 = vsyncpa [#allocation13], 0
    %23 = vsyncpa [#allocation8], 0
    %s24 = scalar_lea.sflag [#allocation8], 1
    %25 = vsyncpa %s24, 0
    %26 = vsyncpa [#allocation17], 0
    %s27 = scalar_lea.sflag [#allocation17], 1
    %28 = vsyncpa %s27, 0
    loop: start=0, step=1, limit=4
    $region2: #{tpu_custom_call.1} parent=1 // loop_pre_header
      _
    $region3: #{tpu_custom_call.1} parent=1 // loop_header
      %s30 = sphi 0, %s34
      %p31 = scmp.ge.s32.totalorder %s30, 4
      %s37 = sphi 0, %s49
      %s38 = sphi 0, %s45
      %s39 = sphi 0, %s37
      %s40 = sphi 0, %s38
      %s41 = sphi 0, %s39
      %s42 = sphi 0, %s40
      %s54 = sphi 0, %s56
      %s57 = sphi 0, %s54
      %s58 = sphi 0, %s57
      %s74 = sphi 0, %s58
      %s80 = sphi 0, %s82
      %s83 = sphi 0, %s80
      %s84 = sphi 0, %s83
      %s100 = sphi 0, %s84
      %s106 = sphi 0, %s108
      %s109 = sphi 0, %s106
      %s110 = sphi 0, %s109
      %s126 = sphi 0, %s110
      %s130 = sphi 0, %s130
      %s132 = sphi 0, %s130
      %s133 = sphi 0, %s132
      %s147 = sphi 0, %s133
      %s151 = sphi 0, %s151
      %s153 = sphi 0, %s151
      %s154 = sphi 0, %s153
      %s168 = sphi 0, %s154
      %s172 = sphi 0, %s172
      %s174 = sphi 0, %s172
      %s175 = sphi 0, %s174
      %s189 = sphi 0, %s175
      %s193 = sphi 0, %s193
      %s195 = sphi 0, %s193
      %s196 = sphi 0, %s195
      %s210 = sphi 0, %s196
      %s214 = sphi 0, %s214
      %s216 = sphi 0, %s214
      %s217 = sphi 0, %s216
      %s231 = sphi 0, %s217
      %s235 = sphi 0, %s235
      %s237 = sphi 0, %s235
      %s238 = sphi 0, %s237
      %s252 = sphi 0, %s238
      %s260 = sphi 0, %s262
      %s263 = sphi 0, %s260
      %s264 = sphi 0, %s263
      %s280 = sphi 0, %s264
      %s288 = sphi 0, %s290
      %s291 = sphi 0, %s288
      %s292 = sphi 0, %s291
      %s308 = sphi 0, %s292
    $region4: #{tpu_custom_call.1} parent=1 // loop_header_branch
      %33 = sbr.rel (%p31) target = $region8
    $region5: #{tpu_custom_call.1} parent=1 // loop_body
      %s35 = ssub.s32 %s30, 1
      %s36 = ssub.s32 %s30, 2
      %s43 = sadd.s32 1, %s38
      %p44 = scmp.ge.s32.totalorder %s43, 1
      %s45 = scalar_select %p44, 0, %s43
      %s46 = sadd.s32 1, %s37
      %s47 = scalar_select %p44, %s46, %s37
      %p48 = scmp.ge.s32.totalorder %s47, 2
      %s49 = scalar_select %p48, 0, %s47
      %s50 = ssub.s32 %s37, %s49
      %s51 = ssub.s32 %s38, %s45
      %s52 = sor.u32 %s50, %s51
      %p53 = scmp.eq.s32.totalorder %s52, 0
      %s55 = sadd.s32 %s54, 1
      %s56 = scalar_select %p53, %s54, %s55
      %p59 = pneg %p53
      %p60 = scmp.eq.s32.totalorder %s30, 1
      %p61 = por %p59, %p60
      %p62 = scmp.ne.s32.totalorder %s54, %s57
      %p63 = scmp.eq.s32.totalorder %s30, 0
      %p64 = por %p62, %p63
      %p65 = scmp.ne.s32.totalorder %s54, %s57
      %p66 = scmp.eq.s32.totalorder %s35, 1
      %p67 = por %p65, %p66
      %p68 = scmp.ne.s32.totalorder %s57, %s58
      %p69 = scmp.eq.s32.totalorder %s35, 0
      %p70 = por %p68, %p69
      %p71 = scmp.ne.s32.totalorder %s57, %s58
      %p72 = scmp.eq.s32.totalorder %s36, 1
      %p73 = por %p71, %p72
      %p75 = scmp.ne.s32.totalorder %s58, %s74
      %p76 = scmp.eq.s32.totalorder %s36, 0
      %p77 = por %p75, %p76
      %s78 = ssub.s32 %s37, %s49
      %p79 = scmp.eq.s32.totalorder %s78, 0
      %s81 = sadd.s32 %s80, 1
      %s82 = scalar_select %p79, %s80, %s81
      %p85 = pneg %p79
      %p86 = scmp.eq.s32.totalorder %s30, 1
      %p87 = por %p85, %p86
      %p88 = scmp.ne.s32.totalorder %s80, %s83
      %p89 = scmp.eq.s32.totalorder %s30, 0
      %p90 = por %p88, %p89
      %p91 = scmp.ne.s32.totalorder %s80, %s83
      %p92 = scmp.eq.s32.totalorder %s35, 1
      %p93 = por %p91, %p92
      %p94 = scmp.ne.s32.totalorder %s83, %s84
      %p95 = scmp.eq.s32.totalorder %s35, 0
      %p96 = por %p94, %p95
      %p97 = scmp.ne.s32.totalorder %s83, %s84
      %p98 = scmp.eq.s32.totalorder %s36, 1
      %p99 = por %p97, %p98
      %p101 = scmp.ne.s32.totalorder %s84, %s100
      %p102 = scmp.eq.s32.totalorder %s36, 0
      %p103 = por %p101, %p102
      %s104 = ssub.s32 %s37, %s49
      %p105 = scmp.eq.s32.totalorder %s104, 0
      %s107 = sadd.s32 %s106, 1
      %s108 = scalar_select %p105, %s106, %s107
      %p111 = pneg %p105
      %p112 = scmp.eq.s32.totalorder %s30, 1
      %p113 = por %p111, %p112
      %p114 = scmp.ne.s32.totalorder %s106, %s109
      %p115 = scmp.eq.s32.totalorder %s30, 0
      %p116 = por %p114, %p115
      %p117 = scmp.ne.s32.totalorder %s106, %s109
      %p118 = scmp.eq.s32.totalorder %s35, 1
      %p119 = por %p117, %p118
      %p120 = scmp.ne.s32.totalorder %s109, %s110
      %p121 = scmp.eq.s32.totalorder %s35, 0
      %p122 = por %p120, %p121
      %p123 = scmp.ne.s32.totalorder %s109, %s110
      %p124 = scmp.eq.s32.totalorder %s36, 1
      %p125 = por %p123, %p124
      %p127 = scmp.ne.s32.totalorder %s110, %s126
      %p128 = scmp.eq.s32.totalorder %s36, 0
      %p129 = por %p127, %p128
      %s131 = sadd.s32 %s130, 1
      %p134 = scmp.eq.s32.totalorder %s30, 1
      %p135 = scmp.ne.s32.totalorder %s130, %s132
      %p136 = scmp.eq.s32.totalorder %s30, 0
      %p137 = por %p135, %p136
      %p138 = scmp.ne.s32.totalorder %s130, %s132
      %p139 = scmp.eq.s32.totalorder %s35, 1
      %p140 = por %p138, %p139
      %p141 = scmp.ne.s32.totalorder %s132, %s133
      %p142 = scmp.eq.s32.totalorder %s35, 0
      %p143 = por %p141, %p142
      %p144 = scmp.ne.s32.totalorder %s132, %s133
      %p145 = scmp.eq.s32.totalorder %s36, 1
      %p146 = por %p144, %p145
      %p148 = scmp.ne.s32.totalorder %s133, %s147
      %p149 = scmp.eq.s32.totalorder %s36, 0
      %p150 = por %p148, %p149
      %s152 = sadd.s32 %s151, 1
      %p155 = scmp.eq.s32.totalorder %s30, 1
      %p156 = scmp.ne.s32.totalorder %s151, %s153
      %p157 = scmp.eq.s32.totalorder %s30, 0
      %p158 = por %p156, %p157
      %p159 = scmp.ne.s32.totalorder %s151, %s153
      %p160 = scmp.eq.s32.totalorder %s35, 1
      %p161 = por %p159, %p160
      %p162 = scmp.ne.s32.totalorder %s153, %s154
      %p163 = scmp.eq.s32.totalorder %s35, 0
      %p164 = por %p162, %p163
      %p165 = scmp.ne.s32.totalorder %s153, %s154
      %p166 = scmp.eq.s32.totalorder %s36, 1
      %p167 = por %p165, %p166
      %p169 = scmp.ne.s32.totalorder %s154, %s168
      %p170 = scmp.eq.s32.totalorder %s36, 0
      %p171 = por %p169, %p170
      %s173 = sadd.s32 %s172, 1
      %p176 = scmp.eq.s32.totalorder %s30, 1
      %p177 = scmp.ne.s32.totalorder %s172, %s174
      %p178 = scmp.eq.s32.totalorder %s30, 0
      %p179 = por %p177, %p178
      %p180 = scmp.ne.s32.totalorder %s172, %s174
      %p181 = scmp.eq.s32.totalorder %s35, 1
      %p182 = por %p180, %p181
      %p183 = scmp.ne.s32.totalorder %s174, %s175
      %p184 = scmp.eq.s32.totalorder %s35, 0
      %p185 = por %p183, %p184
      %p186 = scmp.ne.s32.totalorder %s174, %s175
      %p187 = scmp.eq.s32.totalorder %s36, 1
      %p188 = por %p186, %p187
      %p190 = scmp.ne.s32.totalorder %s175, %s189
      %p191 = scmp.eq.s32.totalorder %s36, 0
      %p192 = por %p190, %p191
      %s194 = sadd.s32 %s193, 1
      %p197 = scmp.eq.s32.totalorder %s30, 1
      %p198 = scmp.ne.s32.totalorder %s193, %s195
      %p199 = scmp.eq.s32.totalorder %s30, 0
      %p200 = por %p198, %p199
      %p201 = scmp.ne.s32.totalorder %s193, %s195
      %p202 = scmp.eq.s32.totalorder %s35, 1
      %p203 = por %p201, %p202
      %p204 = scmp.ne.s32.totalorder %s195, %s196
      %p205 = scmp.eq.s32.totalorder %s35, 0
      %p206 = por %p204, %p205
      %p207 = scmp.ne.s32.totalorder %s195, %s196
      %p208 = scmp.eq.s32.totalorder %s36, 1
      %p209 = por %p207, %p208
      %p211 = scmp.ne.s32.totalorder %s196, %s210
      %p212 = scmp.eq.s32.totalorder %s36, 0
      %p213 = por %p211, %p212
      %s215 = sadd.s32 %s214, 1
      %p218 = scmp.eq.s32.totalorder %s30, 1
      %p219 = scmp.ne.s32.totalorder %s214, %s216
      %p220 = scmp.eq.s32.totalorder %s30, 0
      %p221 = por %p219, %p220
      %p222 = scmp.ne.s32.totalorder %s214, %s216
      %p223 = scmp.eq.s32.totalorder %s35, 1
      %p224 = por %p222, %p223
      %p225 = scmp.ne.s32.totalorder %s216, %s217
      %p226 = scmp.eq.s32.totalorder %s35, 0
      %p227 = por %p225, %p226
      %p228 = scmp.ne.s32.totalorder %s216, %s217
      %p229 = scmp.eq.s32.totalorder %s36, 1
      %p230 = por %p228, %p229
      %p232 = scmp.ne.s32.totalorder %s217, %s231
      %p233 = scmp.eq.s32.totalorder %s36, 0
      %p234 = por %p232, %p233
      %s236 = sadd.s32 %s235, 1
      %p239 = scmp.eq.s32.totalorder %s30, 1
      %p240 = scmp.ne.s32.totalorder %s235, %s237
      %p241 = scmp.eq.s32.totalorder %s30, 0
      %p242 = por %p240, %p241
      %p243 = scmp.ne.s32.totalorder %s235, %s237
      %p244 = scmp.eq.s32.totalorder %s35, 1
      %p245 = por %p243, %p244
      %p246 = scmp.ne.s32.totalorder %s237, %s238
      %p247 = scmp.eq.s32.totalorder %s35, 0
      %p248 = por %p246, %p247
      %p249 = scmp.ne.s32.totalorder %s237, %s238
      %p250 = scmp.eq.s32.totalorder %s36, 1
      %p251 = por %p249, %p250
      %p253 = scmp.ne.s32.totalorder %s238, %s252
      %p254 = scmp.eq.s32.totalorder %s36, 0
      %p255 = por %p253, %p254
      %s256 = ssub.s32 %s37, %s49
      %s257 = ssub.s32 %s38, %s45
      %s258 = sor.u32 %s256, %s257
      %p259 = scmp.eq.s32.totalorder %s258, 0
      %s261 = sadd.s32 %s260, 1
      %s262 = scalar_select %p259, %s260, %s261
      %p265 = pneg %p259
      %p266 = scmp.eq.s32.totalorder %s30, 1
      %p267 = por %p265, %p266
      %p268 = scmp.ne.s32.totalorder %s260, %s263
      %p269 = scmp.eq.s32.totalorder %s30, 0
      %p270 = por %p268, %p269
      %p271 = scmp.ne.s32.totalorder %s260, %s263
      %p272 = scmp.eq.s32.totalorder %s35, 1
      %p273 = por %p271, %p272
      %p274 = scmp.ne.s32.totalorder %s263, %s264
      %p275 = scmp.eq.s32.totalorder %s35, 0
      %p276 = por %p274, %p275
      %p277 = scmp.ne.s32.totalorder %s263, %s264
      %p278 = scmp.eq.s32.totalorder %s36, 1
      %p279 = por %p277, %p278
      %p281 = scmp.ne.s32.totalorder %s264, %s280
      %p282 = scmp.eq.s32.totalorder %s36, 0
      %p283 = por %p281, %p282
      %s284 = ssub.s32 %s37, %s49
      %s285 = ssub.s32 %s38, %s45
      %s286 = sor.u32 %s284, %s285
      %p287 = scmp.eq.s32.totalorder %s286, 0
      %s289 = sadd.s32 %s288, 1
      %s290 = scalar_select %p287, %s288, %s289
      %p293 = pneg %p287
      %p294 = scmp.eq.s32.totalorder %s30, 1
      %p295 = por %p293, %p294
      %p296 = scmp.ne.s32.totalorder %s288, %s291
      %p297 = scmp.eq.s32.totalorder %s30, 0
      %p298 = por %p296, %p297
      %p299 = scmp.ne.s32.totalorder %s288, %s291
      %p300 = scmp.eq.s32.totalorder %s35, 1
      %p301 = por %p299, %p300
      %p302 = scmp.ne.s32.totalorder %s291, %s292
      %p303 = scmp.eq.s32.totalorder %s35, 0
      %p304 = por %p302, %p303
      %p305 = scmp.ne.s32.totalorder %s291, %s292
      %p306 = scmp.eq.s32.totalorder %s36, 1
      %p307 = por %p305, %p306
      %p309 = scmp.ne.s32.totalorder %s292, %s308
      %p310 = scmp.eq.s32.totalorder %s36, 0
      %p311 = por %p309, %p310
      %p312 = scmp.le.s32.totalorder 1, %s30
      %p313 = scmp.lt.s32.totalorder %s30, 3
      %p314 = pnand %p312, %p313
      %p315 = pneg %p314
      // Predicated region
      $region9: #{tpu_custom_call.1} parent=5 // pred_check
        _
      $region10: #{tpu_custom_call.1} parent=5 // pred_check_branch
        %317 = sbr.rel (%p314) target = $region12
      $region11: #{tpu_custom_call.1} parent=5 // pred_region
        %s318 = ssub.s32 %s30, 1
        // Predicated region
        $region13: #{tpu_custom_call.1} parent=11 // pred_check
          %p319 = pneg %p143
        $region14: #{tpu_custom_call.1} parent=11 // pred_check_branch
          %321 = sbr.rel (%p319) target = $region16
        $region15: #{tpu_custom_call.1} parent=11 // pred_region
          %s323 = ssub.s32 256, 256
          %324 = vsyncadd [#allocation13], %s323
          %s325 = sshll.u32 [#allocation12], 4
          %s326 = int_to_ptr.vmem [resolvable:$true] %s325
          %331 = dma.hbm_to_vmem [thread:$0]  %s3, 256, %s326, [#allocation13], 64, 64, 4
        $region16: #{tpu_custom_call.1} parent=11 // pred_fallthru
          _
        // Predicated region
        $region17: #{tpu_custom_call.1} parent=11 // pred_check
          %p332 = pneg %p164
        $region18: #{tpu_custom_call.1} parent=11 // pred_check_branch
          %334 = sbr.rel (%p332) target = $region20
        $region19: #{tpu_custom_call.1} parent=11 // pred_region
          _
        $region20: #{tpu_custom_call.1} parent=11 // pred_fallthru
          _
        // Predicated region
        $region21: #{tpu_custom_call.1} parent=11 // pred_check
          %p335 = pneg %p185
        $region22: #{tpu_custom_call.1} parent=11 // pred_check_branch
          %337 = sbr.rel (%p335) target = $region24
        $region23: #{tpu_custom_call.1} parent=11 // pred_region
          _
        $region24: #{tpu_custom_call.1} parent=11 // pred_fallthru
          _
        // Predicated region
        $region25: #{tpu_custom_call.1} parent=11 // pred_check
          %p338 = pneg %p206
        $region26: #{tpu_custom_call.1} parent=11 // pred_check_branch
          %340 = sbr.rel (%p338) target = $region28
        $region27: #{tpu_custom_call.1} parent=11 // pred_region
          _
        $region28: #{tpu_custom_call.1} parent=11 // pred_fallthru
          _
        // Predicated region
        $region29: #{tpu_custom_call.1} parent=11 // pred_check
          %p341 = pneg %p227
        $region30: #{tpu_custom_call.1} parent=11 // pred_check_branch
          %343 = sbr.rel (%p341) target = $region32
        $region31: #{tpu_custom_call.1} parent=11 // pred_region
          %s345 = ssub.s32 256, 256
          %346 = vsyncadd [#allocation13], %s345
          %s347 = sshll.u32 [#allocation14], 4
          %s348 = int_to_ptr.vmem [resolvable:$true] %s347
          %353 = dma.hbm_to_vmem [thread:$0]  %s7, 256, %s348, [#allocation13], 64, 64, 4
        $region32: #{tpu_custom_call.1} parent=11 // pred_fallthru
          _
        // Predicated region
        $region33: #{tpu_custom_call.1} parent=11 // pred_check
          %p354 = pneg %p248
        $region34: #{tpu_custom_call.1} parent=11 // pred_check_branch
          %356 = sbr.rel (%p354) target = $region36
        $region35: #{tpu_custom_call.1} parent=11 // pred_region
          _
        $region36: #{tpu_custom_call.1} parent=11 // pred_fallthru
          _
      $region12: #{tpu_custom_call.1} parent=5 // pred_fallthru
        _
      %p357 = scmp.lt.s32.totalorder %s30, 2
      // Predicated region
      $region37: #{tpu_custom_call.1} parent=5 // pred_check
        %p358 = pneg %p357
      $region38: #{tpu_custom_call.1} parent=5 // pred_check_branch
        %360 = sbr.rel (%p358) target = $region40
      $region39: #{tpu_custom_call.1} parent=5 // pred_region
        // Predicated region
        $region41: #{tpu_custom_call.1} parent=39 // pred_check
          %p361 = pneg %p64
        $region42: #{tpu_custom_call.1} parent=39 // pred_check_branch
          %363 = sbr.rel (%p361) target = $region44
        $region43: #{tpu_custom_call.1} parent=39 // pred_region
          %s364 = sand.u32 %s54, 1
          %s365 = scalar_lea.sflag [#allocation7], %s364
          %s366 = sand.u32 %s54, 1
          %s367 = smul.addr %s366, 8
          %s368 = scalar_lea.vmem [#allocation6], %s367
          %s370 = ssub.s32 128, 128
          %371 = vsyncadd %s365, %s370
          %s372 = sadd.s32 %s38, %s37
          %s373 = smul.addr %s372, 128
          %s374 = scalar_lea.hbm %s0, %s373
          %s376 = sshll.u32 %s368, 4
          %s377 = int_to_ptr.vmem [resolvable:$true] %s376
          %379 = dma.hbm_to_vmem [thread:$0]  %s374, 128, %s377, %s365
        $region44: #{tpu_custom_call.1} parent=39 // pred_fallthru
          _
        // Predicated region
        $region45: #{tpu_custom_call.1} parent=39 // pred_check
          %p380 = pneg %p90
        $region46: #{tpu_custom_call.1} parent=39 // pred_check_branch
          %382 = sbr.rel (%p380) target = $region48
        $region47: #{tpu_custom_call.1} parent=39 // pred_region
          %s383 = sand.u32 %s30, 1
          %s384 = scalar_lea.sflag [#allocation10], %s383
          %s385 = sand.u32 %s80, 1
          %s386 = smul.addr %s385, 8
          %s387 = scalar_lea.vmem [#allocation9], %s386
          %s389 = ssub.s32 128, 128
          %390 = vsyncadd %s384, %s389
          %s391 = smul.addr %s37, 128
          %s392 = scalar_lea.hbm %s1, %s391
          %s394 = sshll.u32 %s387, 4
          %s395 = int_to_ptr.vmem [resolvable:$true] %s394
          %397 = dma.hbm_to_vmem [thread:$0]  %s392, 128, %s395, %s384
        $region48: #{tpu_custom_call.1} parent=39 // pred_fallthru
          _
        // Predicated region
        $region49: #{tpu_custom_call.1} parent=39 // pred_check
          %p398 = pneg %p116
        $region50: #{tpu_custom_call.1} parent=39 // pred_check_branch
          %400 = sbr.rel (%p398) target = $region52
        $region51: #{tpu_custom_call.1} parent=39 // pred_region
          %s401 = sand.u32 %s30, 1
          %s402 = scalar_lea.sflag [#allocation10], %s401
          %s403 = sand.u32 %s106, 1
          %s404 = smul.addr %s403, 8
          %s405 = scalar_lea.vmem [#allocation11], %s404
          %s407 = ssub.s32 128, 128
          %408 = vsyncadd %s402, %s407
          %s409 = smul.addr %s37, 128
          %s410 = scalar_lea.hbm %s2, %s409
          %s412 = sshll.u32 %s405, 4
          %s413 = int_to_ptr.vmem [resolvable:$true] %s412
          %415 = dma.hbm_to_vmem [thread:$0]  %s410, 128, %s413, %s402
        $region52: #{tpu_custom_call.1} parent=39 // pred_fallthru
          _
      $region40: #{tpu_custom_call.1} parent=5 // pred_fallthru
        _
      %p416 = scmp.le.s32.totalorder 1, %s30
      %p417 = scmp.lt.s32.totalorder %s30, 3
      %p418 = pnand %p416, %p417
      %p419 = pneg %p418
      // Predicated region
      $region53: #{tpu_custom_call.1} parent=5 // pred_check
        _
      $region54: #{tpu_custom_call.1} parent=5 // pred_check_branch
        %421 = sbr.rel (%p418) target = $region56
      $region55: #{tpu_custom_call.1} parent=5 // pred_region
        %s422 = ssub.s32 %s30, 1
        %s423 = sand.u32 %s57, 1
        %s424 = scalar_lea.sflag [#allocation7], %s423
        %s425 = sand.u32 %s57, 1
        %s426 = smul.addr %s425, 8
        %s427 = scalar_lea.vmem [#allocation6], %s426
        // Predicated region
        $region57: #{tpu_custom_call.1} parent=55 // pred_check
          %p428 = pneg %p70
        $region58: #{tpu_custom_call.1} parent=55 // pred_check_branch
          %430 = sbr.rel (%p428) target = $region60
        $region59: #{tpu_custom_call.1} parent=55 // pred_region
          %431 = dma.done %s424, 128
        $region60: #{tpu_custom_call.1} parent=55 // pred_fallthru
          _
        %s432 = sand.u32 %s35, 1
        %s433 = scalar_lea.sflag [#allocation10], %s432
        %s434 = sand.u32 %s83, 1
        %s435 = smul.addr %s434, 8
        %s436 = scalar_lea.vmem [#allocation9], %s435
        // Predicated region
        $region61: #{tpu_custom_call.1} parent=55 // pred_check
          %p437 = pneg %p96
        $region62: #{tpu_custom_call.1} parent=55 // pred_check_branch
          %439 = sbr.rel (%p437) target = $region64
        $region63: #{tpu_custom_call.1} parent=55 // pred_region
          %440 = dma.done %s433, 128
        $region64: #{tpu_custom_call.1} parent=55 // pred_fallthru
          _
        %s441 = sand.u32 %s35, 1
        %s442 = scalar_lea.sflag [#allocation10], %s441
        %s443 = sand.u32 %s109, 1
        %s444 = smul.addr %s443, 8
        %s445 = scalar_lea.vmem [#allocation11], %s444
        // Predicated region
        $region65: #{tpu_custom_call.1} parent=55 // pred_check
          %p446 = pneg %p122
        $region66: #{tpu_custom_call.1} parent=55 // pred_check_branch
          %448 = sbr.rel (%p446) target = $region68
        $region67: #{tpu_custom_call.1} parent=55 // pred_region
          %449 = dma.done %s442, 128
        $region68: #{tpu_custom_call.1} parent=55 // pred_fallthru
          _
        // Predicated region
        $region69: #{tpu_custom_call.1} parent=55 // pred_check
          %p450 = pneg %p143
        $region70: #{tpu_custom_call.1} parent=55 // pred_check_branch
          %452 = sbr.rel (%p450) target = $region72
        $region71: #{tpu_custom_call.1} parent=55 // pred_region
          %453 = dma.done [#allocation13], 256
        $region72: #{tpu_custom_call.1} parent=55 // pred_fallthru
          _
        // Predicated region
        $region73: #{tpu_custom_call.1} parent=55 // pred_check
          %p454 = pneg %p227
        $region74: #{tpu_custom_call.1} parent=55 // pred_check_branch
          %456 = sbr.rel (%p454) target = $region76
        $region75: #{tpu_custom_call.1} parent=55 // pred_region
          %457 = dma.done [#allocation13], 256
        $region76: #{tpu_custom_call.1} parent=55 // pred_fallthru
          _
        %s458 = sand.u32 %s57, 1
        %s459 = scalar_lea.sflag [#allocation7], %s458
        %s460 = sand.u32 %s57, 1
        %s461 = smul.addr %s460, 8
        %s462 = scalar_lea.vmem [#allocation6], %s461
        %p463 = pneg %p70
        %p464 = pneg %p67
        %s465 = sand.u32 %s35, 1
        %s466 = scalar_lea.sflag [#allocation10], %s465
        %s467 = sand.u32 %s83, 1
        %s468 = smul.addr %s467, 8
        %s469 = scalar_lea.vmem [#allocation9], %s468
        %p470 = pneg %p96
        %p471 = pneg %p93
        %s472 = sand.u32 %s35, 1
        %s473 = scalar_lea.sflag [#allocation10], %s472
        %s474 = sand.u32 %s109, 1
        %s475 = smul.addr %s474, 8
        %s476 = scalar_lea.vmem [#allocation11], %s475
        %p477 = pneg %p122
        %p478 = pneg %p119
        %p479 = pneg %p143
        %p480 = pneg %p140
        %p481 = pneg %p164
        %p482 = pneg %p161
        %p483 = pneg %p185
        %p484 = pneg %p182
        %p485 = pneg %p206
        %p486 = pneg %p203
        %p487 = pneg %p227
        %p488 = pneg %p224
        %p489 = pneg %p248
        %p490 = pneg %p245
        %p491 = pneg %p276
        %p492 = pneg %p273
        %s493 = sand.u32 %s263, 1
        %s494 = scalar_lea.sflag [#allocation8], %s493
        %s495 = sand.u32 %s263, 1
        %s496 = smul.addr %s495, 8
        %s497 = scalar_lea.vmem [#allocation15], %s496
        %p498 = pneg %p304
        %p499 = pneg %p301
        %s500 = sand.u32 %s291, 1
        %s501 = scalar_lea.sflag [#allocation17], %s500
        %s502 = sand.u32 %s291, 1
        %s503 = smul.addr %s502, 8
        %s504 = scalar_lea.vmem [#allocation16], %s503
        %p506 = scmp.eq.s32.totalorder %s40, 0
        // Predicated region
        $region77: #{tpu_custom_call.1} parent=55 // pred_check
          %p507 = pneg %p506
        $region78: #{tpu_custom_call.1} parent=55 // pred_check_branch
          %509 = sbr.rel (%p507) target = $region80
        $region79: #{tpu_custom_call.1} parent=55 // pred_region
          %v510 = vld [vmem:[%s436] sm:$0xff]
          %v511 = vpack.c.bf16 %v510, %v510
          %v512 = vld [vmem:[%s445] sm:$0xff]
          %v513 = vpack.c.bf16 %v512, %v512
          %v514 = vld [vmem:[%s5] sm:$0xf]
          %v515 = vld [vmem:[%s5 + $0x4] sm:$0xf]
          %v516 = vld [vmem:[%s5 + $0x8] sm:$0xf]
          %v517 = vld [vmem:[%s5 + $0xc] sm:$0xf]
          %v518 = vld [vmem:[%s6] sm:$0x1]
          %v520 = vlaneseq
          %v521 = vshrl.u32 %v520, 7
          %v522 = vsub.s32 0, %v521
          %v523 = vrot.slane %v518, %v522
          %v529 = vunpack.c.l.b16 %v514
          %v530 = vunpack.c.l.b16 %v515
          %v531 = vunpack.c.l.b16 %v516
          %v532 = vunpack.c.l.b16 %v517
          %v533 = vpack.c.b16 %v530, %v529
          %v534 = vpack.c.b16 %v532, %v531
          %vm537 = vcmask 261120
          %v539 = vsel %vm537, %v511, 0
          %541 = vmatprep.subr.bf16.mxu0 0
          %542 = vmatpush1.bf16.msra.mxu0 %v533
          %543 = vmatprep.subr.bf16.mxu0 0
          %544 = vmatpush1.bf16.msra.mxu0 %v534
          %545 = vmatprep.subr.bf16.mxu0 0
          %546 = vmatpush1.bf16.msra.mxu0 0
          %547 = vmatprep.subr.bf16.mxu0 0
          %548 = vmatpush1.bf16.msra.mxu0 0
          %549 = vmatprep.subr.bf16.mxu0 0
          %550 = vmatpush1.bf16.msra.mxu0 0
          %551 = vmatprep.subr.bf16.mxu0 0
          %552 = vmatpush1.bf16.msra.mxu0 0
          %553 = vmatprep.subr.bf16.mxu0 0
          %554 = vmatpush1.bf16.msra.mxu0 0
          %555 = vmatprep.subr.bf16.mxu0 0
          %556 = vmatpush1.bf16.msra.mxu0 0
          %557 = vmatprep.subr.bf16.mxu0 0
          %558 = vmatpush1.bf16.msra.mxu0 0
          %559 = vmatprep.subr.bf16.mxu0 0
          %560 = vmatpush1.bf16.msra.mxu0 0
          %561 = vmatprep.subr.bf16.mxu0 0
          %562 = vmatpush1.bf16.msra.mxu0 0
          %563 = vmatprep.subr.bf16.mxu0 0
          %564 = vmatpush1.bf16.msra.mxu0 0
          %565 = vmatprep.subr.bf16.mxu0 0
          %566 = vmatpush1.bf16.msra.mxu0 0
          %567 = vmatprep.subr.bf16.mxu0 0
          %568 = vmatpush1.bf16.msra.mxu0 0
          %569 = vmatprep.subr.bf16.mxu0 0
          %570 = vmatpush1.bf16.msra.mxu0 0
          %571 = vmatprep.subr.bf16.mxu0 0
          %572 = vmatpush1.bf16.msra.mxu0 0
          %573 = vmatprep.mubr.bf16.mxu0 0
          %574 = vmatmul.mubr.bf16.gmra.mrb[0].mxu0 %v539
          %v575 = vpop.f32.mrb[0].mxu0
          %v576 = vadd.f32 %v523, %v575
          %v577 = vpop.f32.mrb[0].mxu0
          %v578 = vpop.f32.mrb[0].mxu0
          %v579 = vpop.f32.mrb[0].mxu0
          %580 = vdwg.mxu0
          %v581 = vld [vmem:[#allocation14] sm:$0xf]
          %v582 = vld [vmem:[#allocation14 + $0x4] sm:$0xf]
          %v583 = vld [vmem:[#allocation14 + $0x8] sm:$0xf]
          %v584 = vld [vmem:[#allocation14 + $0xc] sm:$0xf]
          %v585 = vld [vmem:[%s8] sm:$0x1]
          %v587 = vlaneseq
          %v588 = vshrl.u32 %v587, 7
          %v589 = vsub.s32 0, %v588
          %v590 = vrot.slane %v585, %v589
          %v596 = vunpack.c.l.b16 %v581
          %v597 = vunpack.c.l.b16 %v582
          %v598 = vunpack.c.l.b16 %v583
          %v599 = vunpack.c.l.b16 %v584
          %v600 = vpack.c.b16 %v597, %v596
          %v601 = vpack.c.b16 %v599, %v598
          %v605 = vsel %vm537, %v513, 0
          %607 = vmatprep.subr.bf16.mxu0 0
          %608 = vmatpush1.bf16.msra.mxu0 %v600
          %609 = vmatprep.subr.bf16.mxu0 0
          %610 = vmatpush1.bf16.msra.mxu0 %v601
          %611 = vmatprep.subr.bf16.mxu0 0
          %612 = vmatpush1.bf16.msra.mxu0 0
          %613 = vmatprep.subr.bf16.mxu0 0
          %614 = vmatpush1.bf16.msra.mxu0 0
          %615 = vmatprep.subr.bf16.mxu0 0
          %616 = vmatpush1.bf16.msra.mxu0 0
          %617 = vmatprep.subr.bf16.mxu0 0
          %618 = vmatpush1.bf16.msra.mxu0 0
          %619 = vmatprep.subr.bf16.mxu0 0
          %620 = vmatpush1.bf16.msra.mxu0 0
          %621 = vmatprep.subr.bf16.mxu0 0
          %622 = vmatpush1.bf16.msra.mxu0 0
          %623 = vmatprep.subr.bf16.mxu0 0
          %624 = vmatpush1.bf16.msra.mxu0 0
          %625 = vmatprep.subr.bf16.mxu0 0
          %626 = vmatpush1.bf16.msra.mxu0 0
          %627 = vmatprep.subr.bf16.mxu0 0
          %628 = vmatpush1.bf16.msra.mxu0 0
          %629 = vmatprep.subr.bf16.mxu0 0
          %630 = vmatpush1.bf16.msra.mxu0 0
          %631 = vmatprep.subr.bf16.mxu0 0
          %632 = vmatpush1.bf16.msra.mxu0 0
          %633 = vmatprep.subr.bf16.mxu0 0
          %634 = vmatpush1.bf16.msra.mxu0 0
          %635 = vmatprep.subr.bf16.mxu0 0
          %636 = vmatpush1.bf16.msra.mxu0 0
          %637 = vmatprep.subr.bf16.mxu0 0
          %638 = vmatpush1.bf16.msra.mxu0 0
          %639 = vmatprep.mubr.bf16.mxu0 0
          %640 = vmatmul.mubr.bf16.gmra.mrb[0].mxu0 %v605
          %v641 = vpop.f32.mrb[0].mxu0
          %v642 = vadd.f32 %v590, %v641
          %v643 = vpop.f32.mrb[0].mxu0
          %v644 = vpop.f32.mrb[0].mxu0
          %v645 = vpop.f32.mrb[0].mxu0
          %646 = vdwg.mxu0
          %v647 = vpack.c.bf16 %v576, %v576
          %vm648 = vcmask 257024
          %649 = vst.msk [vmem:[#allocation2] sm:$0xf] %vm648, %v647
          %v650 = vpack.c.bf16 %v642, %v642
          %651 = vst.msk [vmem:[#allocation3] sm:$0xf] %vm648, %v650
        $region80: #{tpu_custom_call.1} parent=55 // pred_fallthru
          _
        %v652 = vld [vmem:[%s427] sm:$0xff]
        %v653 = vpack.c.bf16 %v652, %v652
        %v654 = vld [vmem:[#allocation12] sm:$0xf]
        %v655 = vld [vmem:[#allocation12 + $0x4] sm:$0xf]
        %v656 = vld [vmem:[#allocation12 + $0x8] sm:$0xf]
        %v657 = vld [vmem:[#allocation12 + $0xc] sm:$0xf]
        %v658 = vld [vmem:[%s4] sm:$0x1]
        %v660 = vlaneseq
        %v661 = vshrl.u32 %v660, 7
        %v662 = vsub.s32 0, %v661
        %v663 = vrot.slane %v658, %v662
        %v669 = vunpack.c.l.b16 %v654
        %v670 = vunpack.c.l.b16 %v655
        %v671 = vunpack.c.l.b16 %v656
        %v672 = vunpack.c.l.b16 %v657
        %v673 = vpack.c.b16 %v670, %v669
        %v674 = vpack.c.b16 %v672, %v671
        %vm677 = vcmask 261120
        %v679 = vsel %vm677, %v653, 0
        %681 = vmatprep.subr.bf16.mxu0 0
        %682 = vmatpush1.bf16.msra.mxu0 %v673
        %683 = vmatprep.subr.bf16.mxu0 0
        %684 = vmatpush1.bf16.msra.mxu0 %v674
        %685 = vmatprep.subr.bf16.mxu0 0
        %686 = vmatpush1.bf16.msra.mxu0 0
        %687 = vmatprep.subr.bf16.mxu0 0
        %688 = vmatpush1.bf16.msra.mxu0 0
        %689 = vmatprep.subr.bf16.mxu0 0
        %690 = vmatpush1.bf16.msra.mxu0 0
        %691 = vmatprep.subr.bf16.mxu0 0
        %692 = vmatpush1.bf16.msra.mxu0 0
        %693 = vmatprep.subr.bf16.mxu0 0
        %694 = vmatpush1.bf16.msra.mxu0 0
        %695 = vmatprep.subr.bf16.mxu0 0
        %696 = vmatpush1.bf16.msra.mxu0 0
        %697 = vmatprep.subr.bf16.mxu0 0
        %698 = vmatpush1.bf16.msra.mxu0 0
        %699 = vmatprep.subr.bf16.mxu0 0
        %700 = vmatpush1.bf16.msra.mxu0 0
        %701 = vmatprep.subr.bf16.mxu0 0
        %702 = vmatpush1.bf16.msra.mxu0 0
        %703 = vmatprep.subr.bf16.mxu0 0
        %704 = vmatpush1.bf16.msra.mxu0 0
        %705 = vmatprep.subr.bf16.mxu0 0
        %706 = vmatpush1.bf16.msra.mxu0 0
        %707 = vmatprep.subr.bf16.mxu0 0
        %708 = vmatpush1.bf16.msra.mxu0 0
        %709 = vmatprep.subr.bf16.mxu0 0
        %710 = vmatpush1.bf16.msra.mxu0 0
        %711 = vmatprep.subr.bf16.mxu0 0
        %712 = vmatpush1.bf16.msra.mxu0 0
        %713 = vmatprep.mubr.bf16.mxu0 0
        %714 = vmatmul.mubr.bf16.gmra.mrb[0].mxu0 %v679
        %v715 = vpop.f32.mrb[0].mxu0
        %v716 = vadd.f32 %v663, %v715
        %v717 = vpop.f32.mrb[0].mxu0
        %v718 = vpop.f32.mrb[0].mxu0
        %v719 = vpop.f32.mrb[0].mxu0
        %720 = vdwg.mxu0
        %v721 = vmul.f32 %v716, 0.35355338
        %v722 = vpack.c.bf16 %v721, %v721
        %v723 = vld [vmem:[#allocation2] sm:$0xf]
        %v724 = vld [vmem:[#allocation3] sm:$0xf]
        %vm725 = vcmask 64512
        %v727 = vsel %vm725, %v722, 0
        %v730 = vsel %vm725, %v723, 0
        %732 = vmatprep.subr.bf16.mxu0 0
        %733 = vmatpush1.bf16.xpose.msra.mxu0 %v730
        %734 = vmatprep.subr.bf16.mxu0 0
        %735 = vmatpush1.bf16.xpose.msra.mxu0 0
        %736 = vmatprep.subr.bf16.mxu0 0
        %737 = vmatpush1.bf16.xpose.msra.mxu0 0
        %738 = vmatprep.subr.bf16.mxu0 0
        %739 = vmatpush1.bf16.xpose.msra.mxu0 0
        %740 = vmatprep.subr.bf16.mxu0 0
        %741 = vmatpush1.bf16.xpose.msra.mxu0 0
        %742 = vmatprep.subr.bf16.mxu0 0
        %743 = vmatpush1.bf16.xpose.msra.mxu0 0
        %744 = vmatprep.subr.bf16.mxu0 0
        %745 = vmatpush1.bf16.xpose.msra.mxu0 0
        %746 = vmatprep.subr.bf16.mxu0 0
        %747 = vmatpush1.bf16.xpose.msra.mxu0 0
        %748 = vmatprep.subr.bf16.mxu0 0
        %749 = vmatpush1.bf16.xpose.msra.mxu0 0
        %750 = vmatprep.subr.bf16.mxu0 0
        %751 = vmatpush1.bf16.xpose.msra.mxu0 0
        %752 = vmatprep.subr.bf16.mxu0 0
        %753 = vmatpush1.bf16.xpose.msra.mxu0 0
        %754 = vmatprep.subr.bf16.mxu0 0
        %755 = vmatpush1.bf16.xpose.msra.mxu0 0
        %756 = vmatprep.subr.bf16.mxu0 0
        %757 = vmatpush1.bf16.xpose.msra.mxu0 0
        %758 = vmatprep.subr.bf16.mxu0 0
        %759 = vmatpush1.bf16.xpose.msra.mxu0 0
        %760 = vmatprep.subr.bf16.mxu0 0
        %761 = vmatpush1.bf16.xpose.msra.mxu0 0
        %762 = vmatprep.subr.bf16.mxu0 0
        %763 = vmatpush1.bf16.xpose.msra.mxu0 0
        %764 = vmatprep.mubr.bf16.mxu0 0
        %765 = vmatmul.mubr.bf16.gmra.mrb[0].mxu0 %v727
        %v766 = vpop.f32.mrb[0].mxu0
        %v767 = vadd.f32 0.0, %v766
        %v768 = vpop.f32.mrb[0].mxu0
        %v769 = vpop.f32.mrb[0].mxu0
        %v770 = vpop.f32.mrb[0].mxu0
        %771 = vdwg.mxu0
        %v772 = vsel %vm725, %v767, -inf
        %773 = vmax.xlane.f32.xlu0 %v772
        %v774 = vpop.xlane.xlu0 %773
        %v775 = vsub.f32 %v767, %v774
        %v776 = vmul.f32 %v775, 1.442695
        %v777 = vpow.pop %v776
        %v778 = vsel %vm725, %v777, 0.0
        %779 = vadd.xlane.f32.xlu0 %v778
        %v780 = vpop.xlane.xlu0 %779
        %v781 = vrcp.pop %v780
        %v782 = vmul.f32 %v777, %v781
        %783 = vst.msk [vmem:[#allocation5] sm:$0xff] %vm725, %v782
        %v784 = vpack.c.bf16 %v782, %v782
        %v786 = vsel %vm725, %v784, 0
        %vm788 = vcmask 1043456
        %v790 = vsel %vm788, %v724, 0
        %792 = vmatprep.subr.bf16.mxu0 0
        %793 = vmatpush1.bf16.msra.mxu0 %v790
        %794 = vmatprep.subr.bf16.mxu0 0
        %795 = vmatpush1.bf16.msra.mxu0 0
        %796 = vmatprep.subr.bf16.mxu0 0
        %797 = vmatpush1.bf16.msra.mxu0 0
        %798 = vmatprep.subr.bf16.mxu0 0
        %799 = vmatpush1.bf16.msra.mxu0 0
        %800 = vmatprep.subr.bf16.mxu0 0
        %801 = vmatpush1.bf16.msra.mxu0 0
        %802 = vmatprep.subr.bf16.mxu0 0
        %803 = vmatpush1.bf16.msra.mxu0 0
        %804 = vmatprep.subr.bf16.mxu0 0
        %805 = vmatpush1.bf16.msra.mxu0 0
        %806 = vmatprep.subr.bf16.mxu0 0
        %807 = vmatpush1.bf16.msra.mxu0 0
        %808 = vmatprep.subr.bf16.mxu0 0
        %809 = vmatpush1.bf16.msra.mxu0 0
        %810 = vmatprep.subr.bf16.mxu0 0
        %811 = vmatpush1.bf16.msra.mxu0 0
        %812 = vmatprep.subr.bf16.mxu0 0
        %813 = vmatpush1.bf16.msra.mxu0 0
        %814 = vmatprep.subr.bf16.mxu0 0
        %815 = vmatpush1.bf16.msra.mxu0 0
        %816 = vmatprep.subr.bf16.mxu0 0
        %817 = vmatpush1.bf16.msra.mxu0 0
        %818 = vmatprep.subr.bf16.mxu0 0
        %819 = vmatpush1.bf16.msra.mxu0 0
        %820 = vmatprep.subr.bf16.mxu0 0
        %821 = vmatpush1.bf16.msra.mxu0 0
        %822 = vmatprep.subr.bf16.mxu0 0
        %823 = vmatpush1.bf16.msra.mxu0 0
        %824 = vmatprep.mubr.bf16.mxu0 0
        %825 = vmatmul.mubr.bf16.gmra.mrb[0].mxu0 %v786
        %v826 = vpop.f32.mrb[0].mxu0
        %v827 = vadd.f32 0.0, %v826
        %v828 = vpop.f32.mrb[0].mxu0
        %v829 = vpop.f32.mrb[0].mxu0
        %v830 = vpop.f32.mrb[0].mxu0
        %831 = vdwg.mxu0
        %832 = vst.msk [vmem:[#allocation4] sm:$0xff] %vm725, %v827
        %834 = vrot.lane.b32.xlu0 %v722, 120
        %v835 = vpop.permute.xlu0 %834
        %v837 = vunpack.c.l.b16 %v723
        %v838 = vpack.c.b16 %v837, %v837
        %839 = vrot.lane.b32.xlu0 %v838, 120
        %v840 = vpop.permute.xlu0 %839
        %v842 = vsel %vm725, %v835, 0
        %v845 = vsel %vm725, %v840, 0
        %847 = vmatprep.subr.bf16.mxu0 0
        %848 = vmatpush1.bf16.xpose.msra.mxu0 %v845
        %849 = vmatprep.subr.bf16.mxu0 0
        %850 = vmatpush1.bf16.xpose.msra.mxu0 0
        %851 = vmatprep.subr.bf16.mxu0 0
        %852 = vmatpush1.bf16.xpose.msra.mxu0 0
        %853 = vmatprep.subr.bf16.mxu0 0
        %854 = vmatpush1.bf16.xpose.msra.mxu0 0
        %855 = vmatprep.subr.bf16.mxu0 0
        %856 = vmatpush1.bf16.xpose.msra.mxu0 0
        %857 = vmatprep.subr.bf16.mxu0 0
        %858 = vmatpush1.bf16.xpose.msra.mxu0 0
        %859 = vmatprep.subr.bf16.mxu0 0
        %860 = vmatpush1.bf16.xpose.msra.mxu0 0
        %861 = vmatprep.subr.bf16.mxu0 0
        %862 = vmatpush1.bf16.xpose.msra.mxu0 0
        %863 = vmatprep.subr.bf16.mxu0 0
        %864 = vmatpush1.bf16.xpose.msra.mxu0 0
        %865 = vmatprep.subr.bf16.mxu0 0
        %866 = vmatpush1.bf16.xpose.msra.mxu0 0
        %867 = vmatprep.subr.bf16.mxu0 0
        %868 = vmatpush1.bf16.xpose.msra.mxu0 0
        %869 = vmatprep.subr.bf16.mxu0 0
        %870 = vmatpush1.bf16.xpose.msra.mxu0 0
        %871 = vmatprep.subr.bf16.mxu0 0
        %872 = vmatpush1.bf16.xpose.msra.mxu0 0
        %873 = vmatprep.subr.bf16.mxu0 0
        %874 = vmatpush1.bf16.xpose.msra.mxu0 0
        %875 = vmatprep.subr.bf16.mxu0 0
        %876 = vmatpush1.bf16.xpose.msra.mxu0 0
        %877 = vmatprep.subr.bf16.mxu0 0
        %878 = vmatpush1.bf16.xpose.msra.mxu0 0
        %879 = vmatprep.mubr.bf16.mxu0 0
        %880 = vmatmul.mubr.bf16.gmra.mrb[0].mxu0 %v842
        %v881 = vpop.f32.mrb[0].mxu0
        %v882 = vadd.f32 0.0, %v881
        %v883 = vpop.f32.mrb[0].mxu0
        %v884 = vpop.f32.mrb[0].mxu0
        %v885 = vpop.f32.mrb[0].mxu0
        %886 = vdwg.mxu0
        %v887 = vsel %vm725, %v882, -inf
        %888 = vmax.xlane.f32.xlu0 %v887
        %v889 = vpop.xlane.xlu0 %888
        %v890 = vsub.f32 %v882, %v889
        %v891 = vmul.f32 %v890, 1.442695
        %v892 = vpow.pop %v891
        %v893 = vsel %vm725, %v892, 0.0
        %894 = vadd.xlane.f32.xlu0 %v893
        %v895 = vpop.xlane.xlu0 %894
        %v896 = vrcp.pop %v895
        %v897 = vmul.f32 %v892, %v896
        %899 = vrot.lane.b32.xlu0 %v897, 8
        %v900 = vpop.permute.xlu0 %899
        %vm902 = vcmask 130112
        %903 = vst.msk [vmem:[#allocation5] sm:$0xff] %vm902, %v900
        %v904 = vpack.c.bf16 %v897, %v897
        %v906 = vunpack.c.l.b16 %v724
        %v907 = vpack.c.b16 %v906, %v906
        %908 = vrot.lane.b32.xlu0 %v907, 120
        %v909 = vpop.permute.xlu0 %908
        %v911 = vsel %vm725, %v904, 0
        %v914 = vsel %vm788, %v909, 0
        %916 = vmatprep.subr.bf16.mxu0 0
        %917 = vmatpush1.bf16.msra.mxu0 %v914
        %918 = vmatprep.subr.bf16.mxu0 0
        %919 = vmatpush1.bf16.msra.mxu0 0
        %920 = vmatprep.subr.bf16.mxu0 0
        %921 = vmatpush1.bf16.msra.mxu0 0
        %922 = vmatprep.subr.bf16.mxu0 0
        %923 = vmatpush1.bf16.msra.mxu0 0
        %924 = vmatprep.subr.bf16.mxu0 0
        %925 = vmatpush1.bf16.msra.mxu0 0
        %926 = vmatprep.subr.bf16.mxu0 0
        %927 = vmatpush1.bf16.msra.mxu0 0
        %928 = vmatprep.subr.bf16.mxu0 0
        %929 = vmatpush1.bf16.msra.mxu0 0
        %930 = vmatprep.subr.bf16.mxu0 0
        %931 = vmatpush1.bf16.msra.mxu0 0
        %932 = vmatprep.subr.bf16.mxu0 0
        %933 = vmatpush1.bf16.msra.mxu0 0
        %934 = vmatprep.subr.bf16.mxu0 0
        %935 = vmatpush1.bf16.msra.mxu0 0
        %936 = vmatprep.subr.bf16.mxu0 0
        %937 = vmatpush1.bf16.msra.mxu0 0
        %938 = vmatprep.subr.bf16.mxu0 0
        %939 = vmatpush1.bf16.msra.mxu0 0
        %940 = vmatprep.subr.bf16.mxu0 0
        %941 = vmatpush1.bf16.msra.mxu0 0
        %942 = vmatprep.subr.bf16.mxu0 0
        %943 = vmatpush1.bf16.msra.mxu0 0
        %944 = vmatprep.subr.bf16.mxu0 0
        %945 = vmatpush1.bf16.msra.mxu0 0
        %946 = vmatprep.subr.bf16.mxu0 0
        %947 = vmatpush1.bf16.msra.mxu0 0
        %948 = vmatprep.mubr.bf16.mxu0 0
        %949 = vmatmul.mubr.bf16.gmra.mrb[0].mxu0 %v911
        %v950 = vpop.f32.mrb[0].mxu0
        %v951 = vadd.f32 0.0, %v950
        %v952 = vpop.f32.mrb[0].mxu0
        %v953 = vpop.f32.mrb[0].mxu0
        %v954 = vpop.f32.mrb[0].mxu0
        %955 = vdwg.mxu0
        %957 = vrot.lane.b32.xlu0 %v951, 8
        %v958 = vpop.permute.xlu0 %957
        %960 = vst.msk [vmem:[#allocation4] sm:$0xff] %vm902, %v958
        %961 = vrot.lane.b32.xlu0 %v722, 112
        %v962 = vpop.permute.xlu0 %961
        %963 = vrot.lane.b32.xlu0 %v838, 112
        %v964 = vpop.permute.xlu0 %963
        %v966 = vsel %vm725, %v962, 0
        %v969 = vsel %vm725, %v964, 0
        %971 = vmatprep.subr.bf16.mxu0 0
        %972 = vmatpush1.bf16.xpose.msra.mxu0 %v969
        %973 = vmatprep.subr.bf16.mxu0 0
        %974 = vmatpush1.bf16.xpose.msra.mxu0 0
        %975 = vmatprep.subr.bf16.mxu0 0
        %976 = vmatpush1.bf16.xpose.msra.mxu0 0
        %977 = vmatprep.subr.bf16.mxu0 0
        %978 = vmatpush1.bf16.xpose.msra.mxu0 0
        %979 = vmatprep.subr.bf16.mxu0 0
        %980 = vmatpush1.bf16.xpose.msra.mxu0 0
        %981 = vmatprep.subr.bf16.mxu0 0
        %982 = vmatpush1.bf16.xpose.msra.mxu0 0
        %983 = vmatprep.subr.bf16.mxu0 0
        %984 = vmatpush1.bf16.xpose.msra.mxu0 0
        %985 = vmatprep.subr.bf16.mxu0 0
        %986 = vmatpush1.bf16.xpose.msra.mxu0 0
        %987 = vmatprep.subr.bf16.mxu0 0
        %988 = vmatpush1.bf16.xpose.msra.mxu0 0
        %989 = vmatprep.subr.bf16.mxu0 0
        %990 = vmatpush1.bf16.xpose.msra.mxu0 0
        %991 = vmatprep.subr.bf16.mxu0 0
        %992 = vmatpush1.bf16.xpose.msra.mxu0 0
        %993 = vmatprep.subr.bf16.mxu0 0
        %994 = vmatpush1.bf16.xpose.msra.mxu0 0
        %995 = vmatprep.subr.bf16.mxu0 0
        %996 = vmatpush1.bf16.xpose.msra.mxu0 0
        %997 = vmatprep.subr.bf16.mxu0 0
        %998 = vmatpush1.bf16.xpose.msra.mxu0 0
        %999 = vmatprep.subr.bf16.mxu0 0
        %1000 = vmatpush1.bf16.xpose.msra.mxu0 0
        %1001 = vmatprep.subr.bf16.mxu0 0
        %1002 = vmatpush1.bf16.xpose.msra.mxu0 0
        %1003 = vmatprep.mubr.bf16.mxu0 0
        %1004 = vmatmul.mubr.bf16.gmra.mrb[0].mxu0 %v966
        %v1005 = vpop.f32.mrb[0].mxu0
        %v1006 = vadd.f32 0.0, %v1005
        %v1007 = vpop.f32.mrb[0].mxu0
        %v1008 = vpop.f32.mrb[0].mxu0
        %v1009 = vpop.f32.mrb[0].mxu0
        %1010 = vdwg.mxu0
        %v1011 = vsel %vm725, %v1006, -inf
        %1012 = vmax.xlane.f32.xlu0 %v1011
        %v1013 = vpop.xlane.xlu0 %1012
        %v1014 = vsub.f32 %v1006, %v1013
        %v1015 = vmul.f32 %v1014, 1.442695
        %v1016 = vpow.pop %v1015
        %v1017 = vsel %vm725, %v1016, 0.0
        %1018 = vadd.xlane.f32.xlu0 %v1017
        %v1019 = vpop.xlane.xlu0 %1018
        %v1020 = vrcp.pop %v1019
        %v1021 = vmul.f32 %v1016, %v1020
        %1023 = vrot.lane.b32.xlu0 %v1021, 16
        %v1024 = vpop.permute.xlu0 %1023
        %vm1026 = vcmask 195712
        %1027 = vst.msk [vmem:[#allocation5] sm:$0xff] %vm1026, %v1024
        %v1028 = vpack.c.bf16 %v1021, %v1021
        %1029 = vrot.lane.b32.xlu0 %v907, 112
        %v1030 = vpop.permute.xlu0 %1029
        %v1032 = vsel %vm725, %v1028, 0
        %v1035 = vsel %vm788, %v1030, 0
        %1037 = vmatprep.subr.bf16.mxu0 0
        %1038 = vmatpush1.bf16.msra.mxu0 %v1035
        %1039 = vmatprep.subr.bf16.mxu0 0
        %1040 = vmatpush1.bf16.msra.mxu0 0
        %1041 = vmatprep.subr.bf16.mxu0 0
        %1042 = vmatpush1.bf16.msra.mxu0 0
        %1043 = vmatprep.subr.bf16.mxu0 0
        %1044 = vmatpush1.bf16.msra.mxu0 0
        %1045 = vmatprep.subr.bf16.mxu0 0
        %1046 = vmatpush1.bf16.msra.mxu0 0
        %1047 = vmatprep.subr.bf16.mxu0 0
        %1048 = vmatpush1.bf16.msra.mxu0 0
        %1049 = vmatprep.subr.bf16.mxu0 0
        %1050 = vmatpush1.bf16.msra.mxu0 0
        %1051 = vmatprep.subr.bf16.mxu0 0
        %1052 = vmatpush1.bf16.msra.mxu0 0
        %1053 = vmatprep.subr.bf16.mxu0 0
        %1054 = vmatpush1.bf16.msra.mxu0 0
        %1055 = vmatprep.subr.bf16.mxu0 0
        %1056 = vmatpush1.bf16.msra.mxu0 0
        %1057 = vmatprep.subr.bf16.mxu0 0
        %1058 = vmatpush1.bf16.msra.mxu0 0
        %1059 = vmatprep.subr.bf16.mxu0 0
        %1060 = vmatpush1.bf16.msra.mxu0 0
        %1061 = vmatprep.subr.bf16.mxu0 0
        %1062 = vmatpush1.bf16.msra.mxu0 0
        %1063 = vmatprep.subr.bf16.mxu0 0
        %1064 = vmatpush1.bf16.msra.mxu0 0
        %1065 = vmatprep.subr.bf16.mxu0 0
        %1066 = vmatpush1.bf16.msra.mxu0 0
        %1067 = vmatprep.subr.bf16.mxu0 0
        %1068 = vmatpush1.bf16.msra.mxu0 0
        %1069 = vmatprep.mubr.bf16.mxu0 0
        %1070 = vmatmul.mubr.bf16.gmra.mrb[0].mxu0 %v1032
        %v1071 = vpop.f32.mrb[0].mxu0
        %v1072 = vadd.f32 0.0, %v1071
        %v1073 = vpop.f32.mrb[0].mxu0
        %v1074 = vpop.f32.mrb[0].mxu0
        %v1075 = vpop.f32.mrb[0].mxu0
        %1076 = vdwg.mxu0
        %1078 = vrot.lane.b32.xlu0 %v1072, 16
        %v1079 = vpop.permute.xlu0 %1078
        %1081 = vst.msk [vmem:[#allocation4] sm:$0xff] %vm1026, %v1079
        %1082 = vrot.lane.b32.xlu0 %v722, 104
        %v1083 = vpop.permute.xlu0 %1082
        %1084 = vrot.lane.b32.xlu0 %v838, 104
        %v1085 = vpop.permute.xlu0 %1084
        %v1087 = vsel %vm725, %v1083, 0
        %v1090 = vsel %vm725, %v1085, 0
        %1092 = vmatprep.subr.bf16.mxu0 0
        %1093 = vmatpush1.bf16.xpose.msra.mxu0 %v1090
        %1094 = vmatprep.subr.bf16.mxu0 0
        %1095 = vmatpush1.bf16.xpose.msra.mxu0 0
        %1096 = vmatprep.subr.bf16.mxu0 0
        %1097 = vmatpush1.bf16.xpose.msra.mxu0 0
        %1098 = vmatprep.subr.bf16.mxu0 0
        %1099 = vmatpush1.bf16.xpose.msra.mxu0 0
        %1100 = vmatprep.subr.bf16.mxu0 0
        %1101 = vmatpush1.bf16.xpose.msra.mxu0 0
        %1102 = vmatprep.subr.bf16.mxu0 0
        %1103 = vmatpush1.bf16.xpose.msra.mxu0 0
        %1104 = vmatprep.subr.bf16.mxu0 0
        %1105 = vmatpush1.bf16.xpose.msra.mxu0 0
        %1106 = vmatprep.subr.bf16.mxu0 0
        %1107 = vmatpush1.bf16.xpose.msra.mxu0 0
        %1108 = vmatprep.subr.bf16.mxu0 0
        %1109 = vmatpush1.bf16.xpose.msra.mxu0 0
        %1110 = vmatprep.subr.bf16.mxu0 0
        %1111 = vmatpush1.bf16.xpose.msra.mxu0 0
        %1112 = vmatprep.subr.bf16.mxu0 0
        %1113 = vmatpush1.bf16.xpose.msra.mxu0 0
        %1114 = vmatprep.subr.bf16.mxu0 0
        %1115 = vmatpush1.bf16.xpose.msra.mxu0 0
        %1116 = vmatprep.subr.bf16.mxu0 0
        %1117 = vmatpush1.bf16.xpose.msra.mxu0 0
        %1118 = vmatprep.subr.bf16.mxu0 0
        %1119 = vmatpush1.bf16.xpose.msra.mxu0 0
        %1120 = vmatprep.subr.bf16.mxu0 0
        %1121 = vmatpush1.bf16.xpose.msra.mxu0 0
        %1122 = vmatprep.subr.bf16.mxu0 0
        %1123 = vmatpush1.bf16.xpose.msra.mxu0 0
        %1124 = vmatprep.mubr.bf16.mxu0 0
        %1125 = vmatmul.mubr.bf16.gmra.mrb[0].mxu0 %v1087
        %v1126 = vpop.f32.mrb[0].mxu0
        %v1127 = vadd.f32 0.0, %v1126
        %v1128 = vpop.f32.mrb[0].mxu0
        %v1129 = vpop.f32.mrb[0].mxu0
        %v1130 = vpop.f32.mrb[0].mxu0
        %1131 = vdwg.mxu0
        %v1132 = vsel %vm725, %v1127, -inf
        %1133 = vmax.xlane.f32.xlu0 %v1132
        %v1134 = vpop.xlane.xlu0 %1133
        %v1135 = vsub.f32 %v1127, %v1134
        %v1136 = vmul.f32 %v1135, 1.442695
        %v1137 = vpow.pop %v1136
        %v1138 = vsel %vm725, %v1137, 0.0
        %1139 = vadd.xlane.f32.xlu0 %v1138
        %v1140 = vpop.xlane.xlu0 %1139
        %v1141 = vrcp.pop %v1140
        %v1142 = vmul.f32 %v1137, %v1141
        %1144 = vrot.lane.b32.xlu0 %v1142, 24
        %v1145 = vpop.permute.xlu0 %1144
        %vm1147 = vcmask 261312
        %1148 = vst.msk [vmem:[#allocation5] sm:$0xff] %vm1147, %v1145
        %v1149 = vpack.c.bf16 %v1142, %v1142
        %1150 = vrot.lane.b32.xlu0 %v907, 104
        %v1151 = vpop.permute.xlu0 %1150
        %v1153 = vsel %vm725, %v1149, 0
        %v1156 = vsel %vm788, %v1151, 0
        %1158 = vmatprep.subr.bf16.mxu0 0
        %1159 = vmatpush1.bf16.msra.mxu0 %v1156
        %1160 = vmatprep.subr.bf16.mxu0 0
        %1161 = vmatpush1.bf16.msra.mxu0 0
        %1162 = vmatprep.subr.bf16.mxu0 0
        %1163 = vmatpush1.bf16.msra.mxu0 0
        %1164 = vmatprep.subr.bf16.mxu0 0
        %1165 = vmatpush1.bf16.msra.mxu0 0
        %1166 = vmatprep.subr.bf16.mxu0 0
        %1167 = vmatpush1.bf16.msra.mxu0 0
        %1168 = vmatprep.subr.bf16.mxu0 0
        %1169 = vmatpush1.bf16.msra.mxu0 0
        %1170 = vmatprep.subr.bf16.mxu0 0
        %1171 = vmatpush1.bf16.msra.mxu0 0
        %1172 = vmatprep.subr.bf16.mxu0 0
        %1173 = vmatpush1.bf16.msra.mxu0 0
        %1174 = vmatprep.subr.bf16.mxu0 0
        %1175 = vmatpush1.bf16.msra.mxu0 0
        %1176 = vmatprep.subr.bf16.mxu0 0
        %1177 = vmatpush1.bf16.msra.mxu0 0
        %1178 = vmatprep.subr.bf16.mxu0 0
        %1179 = vmatpush1.bf16.msra.mxu0 0
        %1180 = vmatprep.subr.bf16.mxu0 0
        %1181 = vmatpush1.bf16.msra.mxu0 0
        %1182 = vmatprep.subr.bf16.mxu0 0
        %1183 = vmatpush1.bf16.msra.mxu0 0
        %1184 = vmatprep.subr.bf16.mxu0 0
        %1185 = vmatpush1.bf16.msra.mxu0 0
        %1186 = vmatprep.subr.bf16.mxu0 0
        %1187 = vmatpush1.bf16.msra.mxu0 0
        %1188 = vmatprep.subr.bf16.mxu0 0
        %1189 = vmatpush1.bf16.msra.mxu0 0
        %1190 = vmatprep.mubr.bf16.mxu0 0
        %1191 = vmatmul.mubr.bf16.gmra.mrb[0].mxu0 %v1153
        %v1192 = vpop.f32.mrb[0].mxu0
        %v1193 = vadd.f32 0.0, %v1192
        %v1194 = vpop.f32.mrb[0].mxu0
        %v1195 = vpop.f32.mrb[0].mxu0
        %v1196 = vpop.f32.mrb[0].mxu0
        %1197 = vdwg.mxu0
        %1199 = vrot.lane.b32.xlu0 %v1193, 24
        %v1200 = vpop.permute.xlu0 %1199
        %1202 = vst.msk [vmem:[#allocation4] sm:$0xff] %vm1147, %v1200
        %v1203 = vld [vmem:[#allocation4] sm:$0xff]
        %1204 = vst.msk [vmem:[%s497] sm:$0xff] %vm677, %v1203
        %v1205 = vld [vmem:[#allocation5] sm:$0xff]
        %1206 = vst.msk [vmem:[%s504] sm:$0xff] %vm677, %v1205
        %s1207 = sand.u32 %s263, 1
        %s1208 = scalar_lea.sflag [#allocation8], %s1207
        %s1209 = sand.u32 %s263, 1
        %s1210 = smul.addr %s1209, 8
        %s1211 = scalar_lea.vmem [#allocation15], %s1210
        %s1212 = sand.u32 %s291, 1
        %s1213 = scalar_lea.sflag [#allocation17], %s1212
        %s1214 = sand.u32 %s291, 1
        %s1215 = smul.addr %s1214, 8
        %s1216 = scalar_lea.vmem [#allocation16], %s1215
        // Predicated region
        $region81: #{tpu_custom_call.1} parent=55 // pred_check
          %p1217 = pneg %p273
        $region82: #{tpu_custom_call.1} parent=55 // pred_check_branch
          %1219 = sbr.rel (%p1217) target = $region84
        $region83: #{tpu_custom_call.1} parent=55 // pred_region
          %s1221 = ssub.s32 128, 128
          %1222 = vsyncadd %s1208, %s1221
          %s1223 = sadd.s32 %s40, %s39
          %s1224 = smul.addr %s1223, 128
          %s1225 = scalar_lea.hbm %s9, %s1224
          %s1227 = sshll.u32 %s1211, 4
          %s1228 = int_to_ptr.vmem [resolvable:$true] %s1227
          %1230 = dma.vmem_to_hbm [thread:$0]  %s1228, 128, %s1225, %s1208
        $region84: #{tpu_custom_call.1} parent=55 // pred_fallthru
          _
        // Predicated region
        $region85: #{tpu_custom_call.1} parent=55 // pred_check
          %p1231 = pneg %p301
        $region86: #{tpu_custom_call.1} parent=55 // pred_check_branch
          %1233 = sbr.rel (%p1231) target = $region88
        $region87: #{tpu_custom_call.1} parent=55 // pred_region
          %s1235 = ssub.s32 128, 128
          %1236 = vsyncadd %s1213, %s1235
          %s1237 = sadd.s32 %s40, %s39
          %s1238 = smul.addr %s1237, 128
          %s1239 = scalar_lea.hbm %s10, %s1238
          %s1241 = sshll.u32 %s1216, 4
          %s1242 = int_to_ptr.vmem [resolvable:$true] %s1241
          %1244 = dma.vmem_to_hbm [thread:$0]  %s1242, 128, %s1239, %s1213
        $region88: #{tpu_custom_call.1} parent=55 // pred_fallthru
          _
      $region56: #{tpu_custom_call.1} parent=5 // pred_fallthru
        _
      %p1245 = scmp.le.s32.totalorder 2, %s30
      // Predicated region
      $region89: #{tpu_custom_call.1} parent=5 // pred_check
        %p1246 = pneg %p1245
      $region90: #{tpu_custom_call.1} parent=5 // pred_check_branch
        %1248 = sbr.rel (%p1246) target = $region92
      $region91: #{tpu_custom_call.1} parent=5 // pred_region
        %s1249 = ssub.s32 %s30, 2
        // Predicated region
        $region93: #{tpu_custom_call.1} parent=91 // pred_check
          %p1250 = pneg %p279
        $region94: #{tpu_custom_call.1} parent=91 // pred_check_branch
          %1252 = sbr.rel (%p1250) target = $region96
        $region95: #{tpu_custom_call.1} parent=91 // pred_region
          %s1253 = sand.u32 %s264, 1
          %s1254 = scalar_lea.sflag [#allocation8], %s1253
          %s1255 = sand.u32 %s264, 1
          %s1256 = smul.addr %s1255, 8
          %s1257 = scalar_lea.vmem [#allocation15], %s1256
          %1258 = dma.done %s1254, 128
        $region96: #{tpu_custom_call.1} parent=91 // pred_fallthru
          _
        // Predicated region
        $region97: #{tpu_custom_call.1} parent=91 // pred_check
          %p1259 = pneg %p307
        $region98: #{tpu_custom_call.1} parent=91 // pred_check_branch
          %1261 = sbr.rel (%p1259) target = $region100
        $region99: #{tpu_custom_call.1} parent=91 // pred_region
          %s1262 = sand.u32 %s292, 1
          %s1263 = scalar_lea.sflag [#allocation17], %s1262
          %s1264 = sand.u32 %s292, 1
          %s1265 = smul.addr %s1264, 8
          %s1266 = scalar_lea.vmem [#allocation16], %s1265
          %1267 = dma.done %s1263, 128
        $region100: #{tpu_custom_call.1} parent=91 // pred_fallthru
          _
      $region92: #{tpu_custom_call.1} parent=5 // pred_fallthru
        _
    $region6: #{tpu_custom_call.1} parent=1 // loop_footer
      %s34 = sadd.s32 1, %s30
    $region7: #{tpu_custom_call.1} parent=1 // loop_footer_branch
      %29 = sbr.rel target = $region3
    $region8: #{tpu_custom_call.1} parent=1 // loop_exit
      _
    %1268 = vsyncpa [#allocation7], 1
    %s1269 = scalar_lea.sflag [#allocation7], 1
    %1270 = vsyncpa %s1269, 1
    %1271 = vsyncpa [#allocation10], 1
    %s1272 = scalar_lea.sflag [#allocation10], 1
    %1273 = vsyncpa %s1272, 1
    %1274 = vsyncpa [#allocation13], 1
    %1275 = vsyncpa [#allocation8], 1
    %s1276 = scalar_lea.sflag [#allocation8], 1
    %1277 = vsyncpa %s1276, 1
    %1278 = vsyncpa [#allocation17], 1
    %s1279 = scalar_lea.sflag [#allocation17], 1
    %1280 = vsyncpa %s1279, 1

</llo_original>
